<compile_context>
chip_gen: v7x
topology: tpu7x:2x2x1
jax: 0.10.0
libtpu: 0.0.40
codegen_flags: <defaults>
</compile_context>

<pallas_src>
import jax
import jax.numpy as jnp
import numpy as np
from jax.experimental import pallas as pl
from jax.experimental.pallas import tpu as pltpu

# ---- model hyper-parameters (small, consistent with the module) ------------
EVENT_DIM   = 16
CONTROL_DIM = 4
INIT_DIM    = 8
HIDDEN_DIM  = 32
GRU_LAYERS  = 3
CONCAT_DIM  = EVENT_DIM + 1 + CONTROL_DIM      # event_dim + 1 + control_dim


# ---------------------------- Pallas kernel ---------------------------------
def performance_rnn_kernel(
    events_ref,    # (1, B, 1)     int32 : event ids for this step
    ctrl_ref,      # (1, B, 1+C)   f32   : [default flag | control]
    h0_ref,        # (L, B, H)     f32   : incoming hidden (read only at t==0)
    emb_fc_ref,    # (E, H)        f32   : embedding @ W_cin[:, :E].T + b_cin (fused)
    w_ctrl_t_ref,  # (1+C, H)      f32   : W_cin[:, E:].T
    w_ih_t_ref,    # (L*3, H, H)   f32   : per-layer, per-gate (r,z,n) W_ih.T
    w_hh_t_ref,    # (L*3, H, H)   f32
    b_ih_ref,      # (L*3, 1, H)   f32
    b_hh_ref,      # (L*3, 1, H)   f32
    w_out_t_ref,   # (L, H, E)     f32   : W_out.T split per layer
    b_out_ref,     # (1, E)        f32
    out_ref,       # (1, B, E)     f32   : logits for this step
    h_ref,         # (L, B, H)     f32   : hidden carry (resident across steps)
):
    t = pl.program_id(0)
    L = h0_ref.shape[0]
    B = events_ref.shape[1]
    E = emb_fc_ref.shape[0]

    @pl.when(t == 0)
    def _():
        h_ref[...] = h0_ref[...]

    # embedding lookup fused with concat_input_fc (+ its bias): one-hot matmul.
    ev = events_ref[0]                                              # (B, 1) int32
    onehot = (jax.lax.broadcasted_iota(jnp.int32, (B, E), 1) == ev).astype(jnp.float32)
    x = (jnp.dot(onehot, emb_fc_ref[...], preferred_element_type=jnp.float32)
         + jnp.dot(ctrl_ref[0], w_ctrl_t_ref[...], preferred_element_type=jnp.float32))
    x = jnp.where(x >= 0, x, 0.1 * x)                               # LeakyReLU(0.1)

    # stacked GRU, one time step, PyTorch gate order (r, z, n).
    h_prev = [h_ref[l] for l in range(L)]
    # gh depends only on the previous step's hidden -> hoist out of the layer chain
    gh = [[jnp.dot(h_prev[l], w_hh_t_ref[3 * l + g], preferred_element_type=jnp.float32)
           + b_hh_ref[3 * l + g] for g in range(3)] for l in range(L)]

    hs = []
    for l in range(L):
        gx = [jnp.dot(x, w_ih_t_ref[3 * l + g], preferred_element_type=jnp.float32)
              + b_ih_ref[3 * l + g] for g in range(3)]
        r = jax.nn.sigmoid(gx[0] + gh[l][0])
        z = jax.nn.sigmoid(gx[1] + gh[l][1])
        n = jnp.tanh(gx[2] + r * gh[l][2])              # gh[l][2] already has b_hn
        h_new = (1.0 - z) * n + z * h_prev[l]
        h_ref[l] = h_new
        hs.append(h_new)
        x = h_new
        # TODO(synk): nn.GRU inter-layer dropout (p=0.3) is train-mode only;
        # omitted here (eval-mode forward semantics).

    # output_fc on hidden.permute(1,0,2).reshape(B, L*H) == sum of per-layer matmuls
    logit = jnp.dot(hs[0], w_out_t_ref[0], preferred_element_type=jnp.float32)
    for l in range(1, L):
        logit = logit + jnp.dot(hs[l], w_out_t_ref[l], preferred_element_type=jnp.float32)
    out_ref[0] = logit + b_out_ref[...]


# ---------------------------- wrapper ----------------------------------------
def _resident(shape):
    """Full-array block, constant index_map -> loaded once, stays in VMEM."""
    nd = len(shape)
    return pl.BlockSpec(shape, lambda *_: (0,) * nd)


def _forward_seq_impl(kparams, events3, ctrl_ext, hidden):
    T, B, _ = events3.shape
    L, H, E = GRU_LAYERS, HIDDEN_DIM, EVENT_DIM
    C1 = 1 + CONTROL_DIM

    logits, h_new = pl.pallas_call(
        performance_rnn_kernel,
        out_shape=(jax.ShapeDtypeStruct((T, B, E), jnp.float32),
                   jax.ShapeDtypeStruct((L, B, H), jnp.float32)),
        grid=(T,),
        in_specs=[
            pl.BlockSpec((1, B, 1), lambda t: (t, 0, 0)),    # events (per step)
            pl.BlockSpec((1, B, C1), lambda t: (t, 0, 0)),   # [default|control]
            _resident((L, B, H)),                            # h0
            _resident((E, H)),                               # fused embedding fc (+bias)
            _resident((C1, H)),
            _resident((L * 3, H, H)),
            _resident((L * 3, H, H)),
            _resident((L * 3, 1, H)),
            _resident((L * 3, 1, H)),
            _resident((L, H, E)),
            _resident((1, E)),
        ],
        out_specs=(
            pl.BlockSpec((1, B, E), lambda t: (t, 0, 0)),    # per-step logits
            _resident((L, B, H)),                            # hidden carry / output
        ),
        input_output_aliases={2: 1},    # hidden-in shares the HBM buffer with hidden-out
        compiler_params=pltpu.CompilerParams(
            dimension_semantics=("arbitrary",)),             # T carries state
    )(
        events3, ctrl_ext, hidden,
        kparams["emb_fc"], kparams["w_ctrl_t"],
        kparams["w_ih_t"], kparams["w_hh_t"], kparams["b_ih"], kparams["b_hh"],
        kparams["w_out_t"], kparams["b_out"],
    )
    return logits, h_new


_forward_seq = jax.jit(_forward_seq_impl)


def performance_rnn_forward_steps(kparams, events, controls=None, hidden=None):
    """Run PerformanceRNN.forward for T teacher-forced steps in ONE pallas_call.
       events: (T, B) int; controls: (T, B, CONTROL_DIM) or None; hidden: (L,B,H) or None.
       Returns (logits (T,B,E), hidden (L,B,H))."""
    T, B = events.shape
    if hidden is None:
        hidden = jnp.zeros((GRU_LAYERS, B, HIDDEN_DIM), jnp.float32)
    if controls is None:
        ctrl_ext = jnp.concatenate(
            [jnp.ones((T, B, 1), jnp.float32),
             jnp.zeros((T, B, CONTROL_DIM), jnp.float32)], axis=-1)
    else:
        assert controls.shape == (T, B, CONTROL_DIM)
        ctrl_ext = jnp.concatenate(
            [jnp.zeros((T, B, 1), jnp.float32),
             controls.astype(jnp.float32)], axis=-1)
    events3 = events.astype(jnp.int32)[..., None]
    return _forward_seq(kparams, events3, ctrl_ext, hidden.astype(jnp.float32))


def performance_rnn_forward(kparams, event, control=None, hidden=None):
    """Single-step forward matching PerformanceRNN.forward.
       event: (1, B) int; control: (1, B, CONTROL_DIM) or None; hidden: (L,B,H) or None."""
    assert event.ndim == 2 and event.shape[0] == 1
    return performance_rnn_forward_steps(kparams, event, control, hidden)


def prepare_params(params):
    """Pre-transpose / pre-fuse weights into kernel layout ONCE (no per-step copies)."""
    E, H, L = EVENT_DIM, HIDDEN_DIM, GRU_LAYERS
    w_cin = params["w_cin"]                                         # (H, E+1+C)
    w_ih = jnp.transpose(params["w_ih"].reshape(L, 3, H, H), (0, 1, 3, 2))
    w_hh = jnp.transpose(params["w_hh"].reshape(L, 3, H, H), (0, 1, 3, 2))
    # one-hot rows sum to 1 -> folding b_cin into the fused embedding table is exact
    kp = {
        "emb_fc":   params["embedding"] @ w_cin[:, :E].T + params["b_cin"][None, :],
        "w_ctrl_t": w_cin[:, E:].T,                                 # (1+C, H)
        "w_ih_t":   w_ih.reshape(L * 3, H, H),
        "w_hh_t":   w_hh.reshape(L * 3, H, H),
        "b_ih":     params["b_ih"].reshape(L * 3, 1, H),
        "b_hh":     params["b_hh"].reshape(L * 3, 1, H),
        "w_out_t":  params["w_out"].T.reshape(L, H, E),
        "b_out":    params["b_out"][None, :],
    }
    return jax.tree_util.tree_map(lambda a: a.astype(jnp.float32), kp)


def init_to_hidden(params, init):
    """Plain-JAX glue matching PerformanceRNN.init_to_hidden."""
    B = init.shape[0]
    out = jnp.tanh(init @ params["w_inithid"].T + params["b_inithid"])
    return out.reshape(GRU_LAYERS, B, HIDDEN_DIM)


# ----------------------- deterministic parameter init ------------------------
def make_params(key):
    def xavier(k, shape):
        fan_out, fan_in = shape[0], shape[1]
        std = float(np.sqrt(2.0 / (fan_in + fan_out)))
        return std * jax.random.normal(k, shape, jnp.float32)

    ks = jax.random.split(key, 12)
    params = {
        "embedding": xavier(ks[0], (EVENT_DIM, EVENT_DIM)),
        "w_inithid": xavier(ks[1], (GRU_LAYERS * HIDDEN_DIM, INIT_DIM)),
        "b_inithid": jnp.zeros((GRU_LAYERS * HIDDEN_DIM,), jnp.float32),
        "w_cin":     xavier(ks[2], (HIDDEN_DIM, CONCAT_DIM)),
        "b_cin":     0.01 * jax.random.normal(ks[3], (HIDDEN_DIM,), jnp.float32),
        "w_out":     xavier(ks[4], (EVENT_DIM, GRU_LAYERS * HIDDEN_DIM)),
        "b_out":     jnp.zeros((EVENT_DIM,), jnp.float32),
    }
    bound = 1.0 / float(np.sqrt(HIDDEN_DIM))
    params["w_ih"] = jax.random.uniform(
        ks[5], (GRU_LAYERS, 3 * HIDDEN_DIM, HIDDEN_DIM), jnp.float32, -bound, bound)
    params["w_hh"] = jax.random.uniform(
        ks[6], (GRU_LAYERS, 3 * HIDDEN_DIM, HIDDEN_DIM), jnp.float32, -bound, bound)
    params["b_ih"] = jax.random.uniform(
        ks[7], (GRU_LAYERS, 3 * HIDDEN_DIM), jnp.float32, -bound, bound)
    params["b_hh"] = jax.random.uniform(
        ks[8], (GRU_LAYERS, 3 * HIDDEN_DIM), jnp.float32, -bound, bound)
    return params


# ----------------------- pure-JAX reference (torch-semantics) ----------------
def reference_forward(params, event, control, hidden):
    B = event.shape[1]
    emb = jnp.take(params["embedding"], event[0], axis=0)
    if control is None:
        default = jnp.ones((B, 1), jnp.float32)
        ctrl = jnp.zeros((B, CONTROL_DIM), jnp.float32)
    else:
        default = jnp.zeros((B, 1), jnp.float32)
        ctrl = control[0]
    concat = jnp.concatenate([emb, default, ctrl], axis=-1)
    x = concat @ params["w_cin"].T + params["b_cin"]
    x = jnp.where(x >= 0, x, 0.1 * x)
    H = HIDDEN_DIM
    hs = []
    for l in range(GRU_LAYERS):
        h_prev = hidden[l]
        gx = x @ params["w_ih"][l].T + params["b_ih"][l]
        gh = h_prev @ params["w_hh"][l].T + params["b_hh"][l]
        r = jax.nn.sigmoid(gx[:, :H] + gh[:, :H])
        z = jax.nn.sigmoid(gx[:, H:2 * H] + gh[:, H:2 * H])
        n = jnp.tanh(gx[:, 2 * H:] + r * gh[:, 2 * H:])
        h_new = (1.0 - z) * n + z * h_prev
        hs.append(h_new)
        x = h_new
    h_cat = jnp.concatenate(hs, axis=-1)
    out = h_cat @ params["w_out"].T + params["b_out"]
    return out[None], jnp.stack(hs, axis=0)


# ---------------------------------- main --------------------------------------
if __name__ == "__main__":
    key = jax.random.PRNGKey(0)
    k_param, k_init, k_ctrl, k_evt = jax.random.split(key, 4)

    B, T = 2, 8
    params = make_params(k_param)
    kparams = prepare_params(params)        # kernel-layout weights, built ONCE

    init = jax.random.normal(k_init, (B, INIT_DIM), jnp.float32)
    hidden0 = init_to_hidden(params, init)                       # (L, B, H)

    events = jax.random.randint(k_evt, (T, B), 0, EVENT_DIM, jnp.int32)
    controls = jax.random.uniform(k_ctrl, (T, B, CONTROL_DIM), jnp.float32)

    # ---- single-step forward (T=1), matches PerformanceRNN.forward ----------
    out1, h1 = performance_rnn_forward(kparams, events[:1], controls[:1], hidden0)
    out1 = jax.block_until_ready(out1)
    h1 = jax.block_until_ready(h1)
    out1_ref, h1_ref = reference_forward(params, events[:1], controls[:1], hidden0)
    np.testing.assert_allclose(np.asarray(out1), np.asarray(out1_ref), rtol=1e-4, atol=1e-4)
    np.testing.assert_allclose(np.asarray(h1), np.asarray(h1_ref), rtol=1e-4, atol=1e-4)

    # ---- single-step, control=None path --------------------------------------
    out1n, h1n = performance_rnn_forward(kparams, events[:1], None, hidden0)
    out1n = jax.block_until_ready(out1n)
    out1n_ref, h1n_ref = reference_forward(params, events[:1], None, hidden0)
    np.testing.assert_allclose(np.asarray(out1n), np.asarray(out1n_ref), rtol=1e-4, atol=1e-4)
    np.testing.assert_allclose(np.asarray(h1n), np.asarray(h1n_ref), rtol=1e-4, atol=1e-4)

    # ---- T teacher-forced forward steps in ONE pallas_call -------------------
    outs, hT = performance_rnn_forward_steps(kparams, events, controls, hidden0)
    outs = jax.block_until_ready(outs)
    hT = jax.block_until_ready(hT)

    h_ref = hidden0
    outs_ref = []
    for t in range(T):
        o_ref, h_ref = reference_forward(params, events[t:t + 1], controls[t:t + 1], h_ref)
        outs_ref.append(o_ref[0])
    outs_ref = jnp.stack(outs_ref, axis=0)
    np.testing.assert_allclose(np.asarray(outs), np.asarray(outs_ref), rtol=1e-4, atol=1e-4)
    np.testing.assert_allclose(np.asarray(hT), np.asarray(h_ref), rtol=1e-4, atol=1e-4)

    assert out1.shape == (1, B, EVENT_DIM)
    assert h1.shape == (GRU_LAYERS, B, HIDDEN_DIM)
    assert outs.shape == (T, B, EVENT_DIM)
    assert hT.shape == (GRU_LAYERS, B, HIDDEN_DIM)
    print("KERNEL_OK")
</pallas_src>

<mosaic_0001>
module attributes {stable_mosaic.version = 11 : i64} {
  func.func @performance_rnn_kernel(%arg0: i32, %arg1: memref<1x2x1xi32, #tpu.memory_space<vmem>>, %arg2: memref<1x2x5xf32, #tpu.memory_space<vmem>>, %arg3: memref<3x2x32xf32, #tpu.memory_space<vmem>>, %arg4: memref<16x32xf32, #tpu.memory_space<vmem>>, %arg5: memref<5x32xf32, #tpu.memory_space<vmem>>, %arg6: memref<9x32x32xf32, #tpu.memory_space<vmem>>, %arg7: memref<9x32x32xf32, #tpu.memory_space<vmem>>, %arg8: memref<9x1x32xf32, #tpu.memory_space<vmem>>, %arg9: memref<9x1x32xf32, #tpu.memory_space<vmem>>, %arg10: memref<3x32x16xf32, #tpu.memory_space<vmem>>, %arg11: memref<1x16xf32, #tpu.memory_space<vmem>>, %arg12: memref<1x2x16xf32, #tpu.memory_space<vmem>>, %arg13: memref<3x2x32xf32, #tpu.memory_space<vmem>>) attributes {dimension_semantics = [#tpu.dimension_semantics<arbitrary>], iteration_bounds = array<i64: 1>, scalar_prefetch = 0 : i64, scratch_operands = 0 : i64, tpu.core_type = #tpu.core_type<tc>, window_params = [{transform_indices = @transform_0, window_bounds = array<i64: 1, 2, 1>}, {transform_indices = @transform_1, window_bounds = array<i64: 1, 2, 5>}, {pipeline_mode = #tpu.pipeline_mode<synchronous>, transform_indices = @transform_2, window_bounds = array<i64: 3, 2, 32>}, {pipeline_mode = #tpu.pipeline_mode<synchronous>, transform_indices = @transform_3, window_bounds = array<i64: 16, 32>}, {pipeline_mode = #tpu.pipeline_mode<synchronous>, transform_indices = @transform_4, window_bounds = array<i64: 5, 32>}, {pipeline_mode = #tpu.pipeline_mode<synchronous>, transform_indices = @transform_5, window_bounds = array<i64: 9, 32, 32>}, {pipeline_mode = #tpu.pipeline_mode<synchronous>, transform_indices = @transform_6, window_bounds = array<i64: 9, 32, 32>}, {pipeline_mode = #tpu.pipeline_mode<synchronous>, transform_indices = @transform_7, window_bounds = array<i64: 9, 1, 32>}, {pipeline_mode = #tpu.pipeline_mode<synchronous>, transform_indices = @transform_8, window_bounds = array<i64: 9, 1, 32>}, {pipeline_mode = #tpu.pipeline_mode<synchronous>, transform_indices = @transform_9, window_bounds = array<i64: 3, 32, 16>}, {pipeline_mode = #tpu.pipeline_mode<synchronous>, transform_indices = @transform_10, window_bounds = array<i64: 1, 16>}, {transform_indices = @transform_11, window_bounds = array<i64: 1, 2, 16>}, {pipeline_mode = #tpu.pipeline_mode<synchronous>, transform_indices = @transform_12, window_bounds = array<i64: 3, 2, 32>}]} {
    %c0_i32 = arith.constant 0 : i32
    %0 = arith.cmpi eq, %arg0, %c0_i32 : i32
    %1 = arith.extui %0 : i1 to i32
    %c0_i32_0 = arith.constant 0 : i32
    %2 = arith.cmpi ne, %1, %c0_i32_0 : i32
    scf.if %2 {
      %c0_175 = arith.constant 0 : index
      %c0_176 = arith.constant 0 : index
      %c0_177 = arith.constant 0 : index
      %240 = vector.load %arg3[%c0_175, %c0_176, %c0_177] : memref<3x2x32xf32, #tpu.memory_space<vmem>>, vector<3x2x32xf32>
      %c0_178 = arith.constant 0 : index
      %c0_179 = arith.constant 0 : index
      %c0_180 = arith.constant 0 : index
      %241 = vector.load %arg13[%c0_178, %c0_179, %c0_180] : memref<3x2x32xf32, #tpu.memory_space<vmem>>, vector<3x2x32xf32>
      tpu.vector_store %arg13[%c0_178, %c0_179, %c0_180], %240 {strides = array<i32>} : memref<3x2x32xf32, #tpu.memory_space<vmem>>, vector<3x2x32xf32>,
    } else {
    }
    %c0 = arith.constant 0 : index
    %c0_1 = arith.constant 0 : index
    %c0_2 = arith.constant 0 : index
    %3 = vector.load %arg1[%c0, %c0_1, %c0_2] : memref<1x2x1xi32, #tpu.memory_space<vmem>>, vector<1x2x1xi32>
    %4 = vector.shape_cast %3 : vector<1x2x1xi32> to vector<2x1xi32>
    %5 = tpu.iota {dimensions = array<i32: 1>} : vector<2x16xi32>
    %6 = vector.broadcast %4 : vector<2x1xi32> to vector<2x16xi32>
    %7 = arith.cmpi eq, %5, %6 : vector<2x16xi32>
    %8 = arith.extui %7 : vector<2x16xi1> to vector<2x16xi32>
    %9 = arith.sitofp %8 : vector<2x16xi32> to vector<2x16xf32>
    %c0_3 = arith.constant 0 : index
    %c0_4 = arith.constant 0 : index
    %10 = vector.load %arg4[%c0_3, %c0_4] : memref<16x32xf32, #tpu.memory_space<vmem>>, vector<16x32xf32>
    %cst = arith.constant dense<0.000000e+00> : vector<2x32xf32>
    %11 = tpu.matmul %9, %10, %cst {dimension_numbers = #tpu.dot_dimension_numbers<[1], [0], [0], [1], [0, 0, 1, 1], [], []>} : vector<2x16xf32>, vector<16x32xf32>, vector<2x32xf32> -> vector<2x32xf32>
    %c0_5 = arith.constant 0 : index
    %c0_6 = arith.constant 0 : index
    %c0_7 = arith.constant 0 : index
    %12 = vector.load %arg2[%c0_5, %c0_6, %c0_7] : memref<1x2x5xf32, #tpu.memory_space<vmem>>, vector<1x2x5xf32>
    %13 = vector.shape_cast %12 : vector<1x2x5xf32> to vector<2x5xf32>
    %c0_8 = arith.constant 0 : index
    %c0_9 = arith.constant 0 : index
    %14 = vector.load %arg5[%c0_8, %c0_9] : memref<5x32xf32, #tpu.memory_space<vmem>>, vector<5x32xf32>
    %cst_10 = arith.constant dense<0.000000e+00> : vector<2x32xf32>
    %15 = tpu.matmul %13, %14, %cst_10 {dimension_numbers = #tpu.dot_dimension_numbers<[1], [0], [0], [1], [0, 0, 1, 1], [], []>} : vector<2x5xf32>, vector<5x32xf32>, vector<2x32xf32> -> vector<2x32xf32>
    %16 = arith.addf %11, %15 : vector<2x32xf32>
    %cst_11 = arith.constant 0.000000e+00 : f32
    %17 = vector.broadcast %cst_11 : f32 to vector<2x32xf32>
    %18 = arith.cmpf oge, %16, %17 : vector<2x32xf32>
    %cst_12 = arith.constant 1.000000e-01 : f32
    %19 = vector.broadcast %cst_12 : f32 to vector<2x32xf32>
    %20 = arith.mulf %19, %16 : vector<2x32xf32>
    %21 = arith.select %18, %16, %20 : vector<2x32xi1>, vector<2x32xf32>
    %c0_13 = arith.constant 0 : index
    %c0_14 = arith.constant 0 : index
    %c0_15 = arith.constant 0 : index
    %22 = vector.load %arg13[%c0_13, %c0_14, %c0_15] : memref<3x2x32xf32, #tpu.memory_space<vmem>>, vector<1x2x32xf32>
    %23 = vector.shape_cast %22 : vector<1x2x32xf32> to vector<2x32xf32>
    %c1 = arith.constant 1 : index
    %c0_16 = arith.constant 0 : index
    %c0_17 = arith.constant 0 : index
    %24 = vector.load %arg13[%c1, %c0_16, %c0_17] : memref<3x2x32xf32, #tpu.memory_space<vmem>>, vector<1x2x32xf32>
    %25 = vector.shape_cast %24 : vector<1x2x32xf32> to vector<2x32xf32>
    %c2 = arith.constant 2 : index
    %c0_18 = arith.constant 0 : index
    %c0_19 = arith.constant 0 : index
    %26 = vector.load %arg13[%c2, %c0_18, %c0_19] : memref<3x2x32xf32, #tpu.memory_space<vmem>>, vector<1x2x32xf32>
    %27 = vector.shape_cast %26 : vector<1x2x32xf32> to vector<2x32xf32>
    %c0_20 = arith.constant 0 : index
    %c0_21 = arith.constant 0 : index
    %c0_22 = arith.constant 0 : index
    %28 = vector.load %arg7[%c0_20, %c0_21, %c0_22] : memref<9x32x32xf32, #tpu.memory_space<vmem>>, vector<1x32x32xf32>
    %29 = vector.shape_cast %28 : vector<1x32x32xf32> to vector<32x32xf32>
    %cst_23 = arith.constant dense<0.000000e+00> : vector<2x32xf32>
    %30 = tpu.matmul %23, %29, %cst_23 {dimension_numbers = #tpu.dot_dimension_numbers<[1], [0], [0], [1], [0, 0, 1, 1], [], []>} : vector<2x32xf32>, vector<32x32xf32>, vector<2x32xf32> -> vector<2x32xf32>
    %c0_24 = arith.constant 0 : index
    %c0_25 = arith.constant 0 : index
    %c0_26 = arith.constant 0 : index
    %31 = vector.load %arg9[%c0_24, %c0_25, %c0_26] : memref<9x1x32xf32, #tpu.memory_space<vmem>>, vector<1x1x32xf32>
    %32 = vector.shape_cast %31 : vector<1x1x32xf32> to vector<1x32xf32>
    %33 = vector.broadcast %32 : vector<1x32xf32> to vector<2x32xf32>
    %34 = arith.addf %30, %33 : vector<2x32xf32>
    %c1_27 = arith.constant 1 : index
    %c0_28 = arith.constant 0 : index
    %c0_29 = arith.constant 0 : index
    %35 = vector.load %arg7[%c1_27, %c0_28, %c0_29] : memref<9x32x32xf32, #tpu.memory_space<vmem>>, vector<1x32x32xf32>
    %36 = vector.shape_cast %35 : vector<1x32x32xf32> to vector<32x32xf32>
    %cst_30 = arith.constant dense<0.000000e+00> : vector<2x32xf32>
    %37 = tpu.matmul %23, %36, %cst_30 {dimension_numbers = #tpu.dot_dimension_numbers<[1], [0], [0], [1], [0, 0, 1, 1], [], []>} : vector<2x32xf32>, vector<32x32xf32>, vector<2x32xf32> -> vector<2x32xf32>
    %c1_31 = arith.constant 1 : index
    %c0_32 = arith.constant 0 : index
    %c0_33 = arith.constant 0 : index
    %38 = vector.load %arg9[%c1_31, %c0_32, %c0_33] : memref<9x1x32xf32, #tpu.memory_space<vmem>>, vector<1x1x32xf32>
    %39 = vector.shape_cast %38 : vector<1x1x32xf32> to vector<1x32xf32>
    %40 = vector.broadcast %39 : vector<1x32xf32> to vector<2x32xf32>
    %41 = arith.addf %37, %40 : vector<2x32xf32>
    %c2_34 = arith.constant 2 : index
    %c0_35 = arith.constant 0 : index
    %c0_36 = arith.constant 0 : index
    %42 = vector.load %arg7[%c2_34, %c0_35, %c0_36] : memref<9x32x32xf32, #tpu.memory_space<vmem>>, vector<1x32x32xf32>
    %43 = vector.shape_cast %42 : vector<1x32x32xf32> to vector<32x32xf32>
    %cst_37 = arith.constant dense<0.000000e+00> : vector<2x32xf32>
    %44 = tpu.matmul %23, %43, %cst_37 {dimension_numbers = #tpu.dot_dimension_numbers<[1], [0], [0], [1], [0, 0, 1, 1], [], []>} : vector<2x32xf32>, vector<32x32xf32>, vector<2x32xf32> -> vector<2x32xf32>
    %c2_38 = arith.constant 2 : index
    %c0_39 = arith.constant 0 : index
    %c0_40 = arith.constant 0 : index
    %45 = vector.load %arg9[%c2_38, %c0_39, %c0_40] : memref<9x1x32xf32, #tpu.memory_space<vmem>>, vector<1x1x32xf32>
    %46 = vector.shape_cast %45 : vector<1x1x32xf32> to vector<1x32xf32>
    %47 = vector.broadcast %46 : vector<1x32xf32> to vector<2x32xf32>
    %48 = arith.addf %44, %47 : vector<2x32xf32>
    %c3 = arith.constant 3 : index
    %c0_41 = arith.constant 0 : index
    %c0_42 = arith.constant 0 : index
    %49 = vector.load %arg7[%c3, %c0_41, %c0_42] : memref<9x32x32xf32, #tpu.memory_space<vmem>>, vector<1x32x32xf32>
    %50 = vector.shape_cast %49 : vector<1x32x32xf32> to vector<32x32xf32>
    %cst_43 = arith.constant dense<0.000000e+00> : vector<2x32xf32>
    %51 = tpu.matmul %25, %50, %cst_43 {dimension_numbers = #tpu.dot_dimension_numbers<[1], [0], [0], [1], [0, 0, 1, 1], [], []>} : vector<2x32xf32>, vector<32x32xf32>, vector<2x32xf32> -> vector<2x32xf32>
    %c3_44 = arith.constant 3 : index
    %c0_45 = arith.constant 0 : index
    %c0_46 = arith.constant 0 : index
    %52 = vector.load %arg9[%c3_44, %c0_45, %c0_46] : memref<9x1x32xf32, #tpu.memory_space<vmem>>, vector<1x1x32xf32>
    %53 = vector.shape_cast %52 : vector<1x1x32xf32> to vector<1x32xf32>
    %54 = vector.broadcast %53 : vector<1x32xf32> to vector<2x32xf32>
    %55 = arith.addf %51, %54 : vector<2x32xf32>
    %c4 = arith.constant 4 : index
    %c0_47 = arith.constant 0 : index
    %c0_48 = arith.constant 0 : index
    %56 = vector.load %arg7[%c4, %c0_47, %c0_48] : memref<9x32x32xf32, #tpu.memory_space<vmem>>, vector<1x32x32xf32>
    %57 = vector.shape_cast %56 : vector<1x32x32xf32> to vector<32x32xf32>
    %cst_49 = arith.constant dense<0.000000e+00> : vector<2x32xf32>
    %58 = tpu.matmul %25, %57, %cst_49 {dimension_numbers = #tpu.dot_dimension_numbers<[1], [0], [0], [1], [0, 0, 1, 1], [], []>} : vector<2x32xf32>, vector<32x32xf32>, vector<2x32xf32> -> vector<2x32xf32>
    %c4_50 = arith.constant 4 : index
    %c0_51 = arith.constant 0 : index
    %c0_52 = arith.constant 0 : index
    %59 = vector.load %arg9[%c4_50, %c0_51, %c0_52] : memref<9x1x32xf32, #tpu.memory_space<vmem>>, vector<1x1x32xf32>
    %60 = vector.shape_cast %59 : vector<1x1x32xf32> to vector<1x32xf32>
    %61 = vector.broadcast %60 : vector<1x32xf32> to vector<2x32xf32>
    %62 = arith.addf %58, %61 : vector<2x32xf32>
    %c5 = arith.constant 5 : index
    %c0_53 = arith.constant 0 : index
    %c0_54 = arith.constant 0 : index
    %63 = vector.load %arg7[%c5, %c0_53, %c0_54] : memref<9x32x32xf32, #tpu.memory_space<vmem>>, vector<1x32x32xf32>
    %64 = vector.shape_cast %63 : vector<1x32x32xf32> to vector<32x32xf32>
    %cst_55 = arith.constant dense<0.000000e+00> : vector<2x32xf32>
    %65 = tpu.matmul %25, %64, %cst_55 {dimension_numbers = #tpu.dot_dimension_numbers<[1], [0], [0], [1], [0, 0, 1, 1], [], []>} : vector<2x32xf32>, vector<32x32xf32>, vector<2x32xf32> -> vector<2x32xf32>
    %c5_56 = arith.constant 5 : index
    %c0_57 = arith.constant 0 : index
    %c0_58 = arith.constant 0 : index
    %66 = vector.load %arg9[%c5_56, %c0_57, %c0_58] : memref<9x1x32xf32, #tpu.memory_space<vmem>>, vector<1x1x32xf32>
    %67 = vector.shape_cast %66 : vector<1x1x32xf32> to vector<1x32xf32>
    %68 = vector.broadcast %67 : vector<1x32xf32> to vector<2x32xf32>
    %69 = arith.addf %65, %68 : vector<2x32xf32>
    %c6 = arith.constant 6 : index
    %c0_59 = arith.constant 0 : index
    %c0_60 = arith.constant 0 : index
    %70 = vector.load %arg7[%c6, %c0_59, %c0_60] : memref<9x32x32xf32, #tpu.memory_space<vmem>>, vector<1x32x32xf32>
    %71 = vector.shape_cast %70 : vector<1x32x32xf32> to vector<32x32xf32>
    %cst_61 = arith.constant dense<0.000000e+00> : vector<2x32xf32>
    %72 = tpu.matmul %27, %71, %cst_61 {dimension_numbers = #tpu.dot_dimension_numbers<[1], [0], [0], [1], [0, 0, 1, 1], [], []>} : vector<2x32xf32>, vector<32x32xf32>, vector<2x32xf32> -> vector<2x32xf32>
    %c6_62 = arith.constant 6 : index
    %c0_63 = arith.constant 0 : index
    %c0_64 = arith.constant 0 : index
    %73 = vector.load %arg9[%c6_62, %c0_63, %c0_64] : memref<9x1x32xf32, #tpu.memory_space<vmem>>, vector<1x1x32xf32>
    %74 = vector.shape_cast %73 : vector<1x1x32xf32> to vector<1x32xf32>
    %75 = vector.broadcast %74 : vector<1x32xf32> to vector<2x32xf32>
    %76 = arith.addf %72, %75 : vector<2x32xf32>
    %c7 = arith.constant 7 : index
    %c0_65 = arith.constant 0 : index
    %c0_66 = arith.constant 0 : index
    %77 = vector.load %arg7[%c7, %c0_65, %c0_66] : memref<9x32x32xf32, #tpu.memory_space<vmem>>, vector<1x32x32xf32>
    %78 = vector.shape_cast %77 : vector<1x32x32xf32> to vector<32x32xf32>
    %cst_67 = arith.constant dense<0.000000e+00> : vector<2x32xf32>
    %79 = tpu.matmul %27, %78, %cst_67 {dimension_numbers = #tpu.dot_dimension_numbers<[1], [0], [0], [1], [0, 0, 1, 1], [], []>} : vector<2x32xf32>, vector<32x32xf32>, vector<2x32xf32> -> vector<2x32xf32>
    %c7_68 = arith.constant 7 : index
    %c0_69 = arith.constant 0 : index
    %c0_70 = arith.constant 0 : index
    %80 = vector.load %arg9[%c7_68, %c0_69, %c0_70] : memref<9x1x32xf32, #tpu.memory_space<vmem>>, vector<1x1x32xf32>
    %81 = vector.shape_cast %80 : vector<1x1x32xf32> to vector<1x32xf32>
    %82 = vector.broadcast %81 : vector<1x32xf32> to vector<2x32xf32>
    %83 = arith.addf %79, %82 : vector<2x32xf32>
    %c8 = arith.constant 8 : index
    %c0_71 = arith.constant 0 : index
    %c0_72 = arith.constant 0 : index
    %84 = vector.load %arg7[%c8, %c0_71, %c0_72] : memref<9x32x32xf32, #tpu.memory_space<vmem>>, vector<1x32x32xf32>
    %85 = vector.shape_cast %84 : vector<1x32x32xf32> to vector<32x32xf32>
    %cst_73 = arith.constant dense<0.000000e+00> : vector<2x32xf32>
    %86 = tpu.matmul %27, %85, %cst_73 {dimension_numbers = #tpu.dot_dimension_numbers<[1], [0], [0], [1], [0, 0, 1, 1], [], []>} : vector<2x32xf32>, vector<32x32xf32>, vector<2x32xf32> -> vector<2x32xf32>
    %c8_74 = arith.constant 8 : index
    %c0_75 = arith.constant 0 : index
    %c0_76 = arith.constant 0 : index
    %87 = vector.load %arg9[%c8_74, %c0_75, %c0_76] : memref<9x1x32xf32, #tpu.memory_space<vmem>>, vector<1x1x32xf32>
    %88 = vector.shape_cast %87 : vector<1x1x32xf32> to vector<1x32xf32>
    %89 = vector.broadcast %88 : vector<1x32xf32> to vector<2x32xf32>
    %90 = arith.addf %86, %89 : vector<2x32xf32>
    %c0_77 = arith.constant 0 : index
    %c0_78 = arith.constant 0 : index
    %c0_79 = arith.constant 0 : index
    %91 = vector.load %arg6[%c0_77, %c0_78, %c0_79] : memref<9x32x32xf32, #tpu.memory_space<vmem>>, vector<1x32x32xf32>
    %92 = vector.shape_cast %91 : vector<1x32x32xf32> to vector<32x32xf32>
    %cst_80 = arith.constant dense<0.000000e+00> : vector<2x32xf32>
    %93 = tpu.matmul %21, %92, %cst_80 {dimension_numbers = #tpu.dot_dimension_numbers<[1], [0], [0], [1], [0, 0, 1, 1], [], []>} : vector<2x32xf32>, vector<32x32xf32>, vector<2x32xf32> -> vector<2x32xf32>
    %c0_81 = arith.constant 0 : index
    %c0_82 = arith.constant 0 : index
    %c0_83 = arith.constant 0 : index
    %94 = vector.load %arg8[%c0_81, %c0_82, %c0_83] : memref<9x1x32xf32, #tpu.memory_space<vmem>>, vector<1x1x32xf32>
    %95 = vector.shape_cast %94 : vector<1x1x32xf32> to vector<1x32xf32>
    %96 = vector.broadcast %95 : vector<1x32xf32> to vector<2x32xf32>
    %97 = arith.addf %93, %96 : vector<2x32xf32>
    %c1_84 = arith.constant 1 : index
    %c0_85 = arith.constant 0 : index
    %c0_86 = arith.constant 0 : index
    %98 = vector.load %arg6[%c1_84, %c0_85, %c0_86] : memref<9x32x32xf32, #tpu.memory_space<vmem>>, vector<1x32x32xf32>
    %99 = vector.shape_cast %98 : vector<1x32x32xf32> to vector<32x32xf32>
    %cst_87 = arith.constant dense<0.000000e+00> : vector<2x32xf32>
    %100 = tpu.matmul %21, %99, %cst_87 {dimension_numbers = #tpu.dot_dimension_numbers<[1], [0], [0], [1], [0, 0, 1, 1], [], []>} : vector<2x32xf32>, vector<32x32xf32>, vector<2x32xf32> -> vector<2x32xf32>
    %c1_88 = arith.constant 1 : index
    %c0_89 = arith.constant 0 : index
    %c0_90 = arith.constant 0 : index
    %101 = vector.load %arg8[%c1_88, %c0_89, %c0_90] : memref<9x1x32xf32, #tpu.memory_space<vmem>>, vector<1x1x32xf32>
    %102 = vector.shape_cast %101 : vector<1x1x32xf32> to vector<1x32xf32>
    %103 = vector.broadcast %102 : vector<1x32xf32> to vector<2x32xf32>
    %104 = arith.addf %100, %103 : vector<2x32xf32>
    %c2_91 = arith.constant 2 : index
    %c0_92 = arith.constant 0 : index
    %c0_93 = arith.constant 0 : index
    %105 = vector.load %arg6[%c2_91, %c0_92, %c0_93] : memref<9x32x32xf32, #tpu.memory_space<vmem>>, vector<1x32x32xf32>
    %106 = vector.shape_cast %105 : vector<1x32x32xf32> to vector<32x32xf32>
    %cst_94 = arith.constant dense<0.000000e+00> : vector<2x32xf32>
    %107 = tpu.matmul %21, %106, %cst_94 {dimension_numbers = #tpu.dot_dimension_numbers<[1], [0], [0], [1], [0, 0, 1, 1], [], []>} : vector<2x32xf32>, vector<32x32xf32>, vector<2x32xf32> -> vector<2x32xf32>
    %c2_95 = arith.constant 2 : index
    %c0_96 = arith.constant 0 : index
    %c0_97 = arith.constant 0 : index
    %108 = vector.load %arg8[%c2_95, %c0_96, %c0_97] : memref<9x1x32xf32, #tpu.memory_space<vmem>>, vector<1x1x32xf32>
    %109 = vector.shape_cast %108 : vector<1x1x32xf32> to vector<1x32xf32>
    %110 = vector.broadcast %109 : vector<1x32xf32> to vector<2x32xf32>
    %111 = arith.addf %107, %110 : vector<2x32xf32>
    %112 = arith.addf %97, %34 : vector<2x32xf32>
    %113 = arith.negf %112 : vector<2x32xf32>
    %114 = math.exp %113 : vector<2x32xf32>
    %cst_98 = arith.constant 1.000000e+00 : f32
    %115 = vector.broadcast %cst_98 : f32 to vector<2x32xf32>
    %116 = arith.addf %115, %114 : vector<2x32xf32>
    %117 = arith.divf %115, %116 : vector<2x32xf32>
    %118 = arith.addf %104, %41 : vector<2x32xf32>
    %119 = arith.negf %118 : vector<2x32xf32>
    %120 = math.exp %119 : vector<2x32xf32>
    %cst_99 = arith.constant 1.000000e+00 : f32
    %121 = vector.broadcast %cst_99 : f32 to vector<2x32xf32>
    %122 = arith.addf %121, %120 : vector<2x32xf32>
    %123 = arith.divf %121, %122 : vector<2x32xf32>
    %124 = arith.mulf %117, %48 : vector<2x32xf32>
    %125 = arith.addf %111, %124 : vector<2x32xf32>
    %126 = math.tanh %125 : vector<2x32xf32>
    %cst_100 = arith.constant 1.000000e+00 : f32
    %127 = vector.broadcast %cst_100 : f32 to vector<2x32xf32>
    %128 = arith.subf %127, %123 : vector<2x32xf32>
    %129 = arith.mulf %128, %126 : vector<2x32xf32>
    %130 = arith.mulf %123, %23 : vector<2x32xf32>
    %131 = arith.addf %129, %130 : vector<2x32xf32>
    %c0_101 = arith.constant 0 : index
    %c0_102 = arith.constant 0 : index
    %c0_103 = arith.constant 0 : index
    %132 = vector.load %arg13[%c0_101, %c0_102, %c0_103] : memref<3x2x32xf32, #tpu.memory_space<vmem>>, vector<1x2x32xf32>
    %133 = vector.shape_cast %132 : vector<1x2x32xf32> to vector<2x32xf32>
    %134 = vector.shape_cast %131 : vector<2x32xf32> to vector<1x2x32xf32>
    tpu.vector_store %arg13[%c0_101, %c0_102, %c0_103], %134 {strides = array<i32>} : memref<3x2x32xf32, #tpu.memory_space<vmem>>, vector<1x2x32xf32>,
    %c3_104 = arith.constant 3 : index
    %c0_105 = arith.constant 0 : index
    %c0_106 = arith.constant 0 : index
    %135 = vector.load %arg6[%c3_104, %c0_105, %c0_106] : memref<9x32x32xf32, #tpu.memory_space<vmem>>, vector<1x32x32xf32>
    %136 = vector.shape_cast %135 : vector<1x32x32xf32> to vector<32x32xf32>
    %cst_107 = arith.constant dense<0.000000e+00> : vector<2x32xf32>
    %137 = tpu.matmul %131, %136, %cst_107 {dimension_numbers = #tpu.dot_dimension_numbers<[1], [0], [0], [1], [0, 0, 1, 1], [], []>} : vector<2x32xf32>, vector<32x32xf32>, vector<2x32xf32> -> vector<2x32xf32>
    %c3_108 = arith.constant 3 : index
    %c0_109 = arith.constant 0 : index
    %c0_110 = arith.constant 0 : index
    %138 = vector.load %arg8[%c3_108, %c0_109, %c0_110] : memref<9x1x32xf32, #tpu.memory_space<vmem>>, vector<1x1x32xf32>
    %139 = vector.shape_cast %138 : vector<1x1x32xf32> to vector<1x32xf32>
    %140 = vector.broadcast %139 : vector<1x32xf32> to vector<2x32xf32>
    %141 = arith.addf %137, %140 : vector<2x32xf32>
    %c4_111 = arith.constant 4 : index
    %c0_112 = arith.constant 0 : index
    %c0_113 = arith.constant 0 : index
    %142 = vector.load %arg6[%c4_111, %c0_112, %c0_113] : memref<9x32x32xf32, #tpu.memory_space<vmem>>, vector<1x32x32xf32>
    %143 = vector.shape_cast %142 : vector<1x32x32xf32> to vector<32x32xf32>
    %cst_114 = arith.constant dense<0.000000e+00> : vector<2x32xf32>
    %144 = tpu.matmul %131, %143, %cst_114 {dimension_numbers = #tpu.dot_dimension_numbers<[1], [0], [0], [1], [0, 0, 1, 1], [], []>} : vector<2x32xf32>, vector<32x32xf32>, vector<2x32xf32> -> vector<2x32xf32>
    %c4_115 = arith.constant 4 : index
    %c0_116 = arith.constant 0 : index
    %c0_117 = arith.constant 0 : index
    %145 = vector.load %arg8[%c4_115, %c0_116, %c0_117] : memref<9x1x32xf32, #tpu.memory_space<vmem>>, vector<1x1x32xf32>
    %146 = vector.shape_cast %145 : vector<1x1x32xf32> to vector<1x32xf32>
    %147 = vector.broadcast %146 : vector<1x32xf32> to vector<2x32xf32>
    %148 = arith.addf %144, %147 : vector<2x32xf32>
    %c5_118 = arith.constant 5 : index
    %c0_119 = arith.constant 0 : index
    %c0_120 = arith.constant 0 : index
    %149 = vector.load %arg6[%c5_118, %c0_119, %c0_120] : memref<9x32x32xf32, #tpu.memory_space<vmem>>, vector<1x32x32xf32>
    %150 = vector.shape_cast %149 : vector<1x32x32xf32> to vector<32x32xf32>
    %cst_121 = arith.constant dense<0.000000e+00> : vector<2x32xf32>
    %151 = tpu.matmul %131, %150, %cst_121 {dimension_numbers = #tpu.dot_dimension_numbers<[1], [0], [0], [1], [0, 0, 1, 1], [], []>} : vector<2x32xf32>, vector<32x32xf32>, vector<2x32xf32> -> vector<2x32xf32>
    %c5_122 = arith.constant 5 : index
    %c0_123 = arith.constant 0 : index
    %c0_124 = arith.constant 0 : index
    %152 = vector.load %arg8[%c5_122, %c0_123, %c0_124] : memref<9x1x32xf32, #tpu.memory_space<vmem>>, vector<1x1x32xf32>
    %153 = vector.shape_cast %152 : vector<1x1x32xf32> to vector<1x32xf32>
    %154 = vector.broadcast %153 : vector<1x32xf32> to vector<2x32xf32>
    %155 = arith.addf %151, %154 : vector<2x32xf32>
    %156 = arith.addf %141, %55 : vector<2x32xf32>
    %157 = arith.negf %156 : vector<2x32xf32>
    %158 = math.exp %157 : vector<2x32xf32>
    %cst_125 = arith.constant 1.000000e+00 : f32
    %159 = vector.broadcast %cst_125 : f32 to vector<2x32xf32>
    %160 = arith.addf %159, %158 : vector<2x32xf32>
    %161 = arith.divf %159, %160 : vector<2x32xf32>
    %162 = arith.addf %148, %62 : vector<2x32xf32>
    %163 = arith.negf %162 : vector<2x32xf32>
    %164 = math.exp %163 : vector<2x32xf32>
    %cst_126 = arith.constant 1.000000e+00 : f32
    %165 = vector.broadcast %cst_126 : f32 to vector<2x32xf32>
    %166 = arith.addf %165, %164 : vector<2x32xf32>
    %167 = arith.divf %165, %166 : vector<2x32xf32>
    %168 = arith.mulf %161, %69 : vector<2x32xf32>
    %169 = arith.addf %155, %168 : vector<2x32xf32>
    %170 = math.tanh %169 : vector<2x32xf32>
    %cst_127 = arith.constant 1.000000e+00 : f32
    %171 = vector.broadcast %cst_127 : f32 to vector<2x32xf32>
    %172 = arith.subf %171, %167 : vector<2x32xf32>
    %173 = arith.mulf %172, %170 : vector<2x32xf32>
    %174 = arith.mulf %167, %25 : vector<2x32xf32>
    %175 = arith.addf %173, %174 : vector<2x32xf32>
    %c1_128 = arith.constant 1 : index
    %c0_129 = arith.constant 0 : index
    %c0_130 = arith.constant 0 : index
    %176 = vector.load %arg13[%c1_128, %c0_129, %c0_130] : memref<3x2x32xf32, #tpu.memory_space<vmem>>, vector<1x2x32xf32>
    %177 = vector.shape_cast %176 : vector<1x2x32xf32> to vector<2x32xf32>
    %178 = vector.shape_cast %175 : vector<2x32xf32> to vector<1x2x32xf32>
    tpu.vector_store %arg13[%c1_128, %c0_129, %c0_130], %178 {strides = array<i32>} : memref<3x2x32xf32, #tpu.memory_space<vmem>>, vector<1x2x32xf32>,
    %c6_131 = arith.constant 6 : index
    %c0_132 = arith.constant 0 : index
    %c0_133 = arith.constant 0 : index
    %179 = vector.load %arg6[%c6_131, %c0_132, %c0_133] : memref<9x32x32xf32, #tpu.memory_space<vmem>>, vector<1x32x32xf32>
    %180 = vector.shape_cast %179 : vector<1x32x32xf32> to vector<32x32xf32>
    %cst_134 = arith.constant dense<0.000000e+00> : vector<2x32xf32>
    %181 = tpu.matmul %175, %180, %cst_134 {dimension_numbers = #tpu.dot_dimension_numbers<[1], [0], [0], [1], [0, 0, 1, 1], [], []>} : vector<2x32xf32>, vector<32x32xf32>, vector<2x32xf32> -> vector<2x32xf32>
    %c6_135 = arith.constant 6 : index
    %c0_136 = arith.constant 0 : index
    %c0_137 = arith.constant 0 : index
    %182 = vector.load %arg8[%c6_135, %c0_136, %c0_137] : memref<9x1x32xf32, #tpu.memory_space<vmem>>, vector<1x1x32xf32>
    %183 = vector.shape_cast %182 : vector<1x1x32xf32> to vector<1x32xf32>
    %184 = vector.broadcast %183 : vector<1x32xf32> to vector<2x32xf32>
    %185 = arith.addf %181, %184 : vector<2x32xf32>
    %c7_138 = arith.constant 7 : index
    %c0_139 = arith.constant 0 : index
    %c0_140 = arith.constant 0 : index
    %186 = vector.load %arg6[%c7_138, %c0_139, %c0_140] : memref<9x32x32xf32, #tpu.memory_space<vmem>>, vector<1x32x32xf32>
    %187 = vector.shape_cast %186 : vector<1x32x32xf32> to vector<32x32xf32>
    %cst_141 = arith.constant dense<0.000000e+00> : vector<2x32xf32>
    %188 = tpu.matmul %175, %187, %cst_141 {dimension_numbers = #tpu.dot_dimension_numbers<[1], [0], [0], [1], [0, 0, 1, 1], [], []>} : vector<2x32xf32>, vector<32x32xf32>, vector<2x32xf32> -> vector<2x32xf32>
    %c7_142 = arith.constant 7 : index
    %c0_143 = arith.constant 0 : index
    %c0_144 = arith.constant 0 : index
    %189 = vector.load %arg8[%c7_142, %c0_143, %c0_144] : memref<9x1x32xf32, #tpu.memory_space<vmem>>, vector<1x1x32xf32>
    %190 = vector.shape_cast %189 : vector<1x1x32xf32> to vector<1x32xf32>
    %191 = vector.broadcast %190 : vector<1x32xf32> to vector<2x32xf32>
    %192 = arith.addf %188, %191 : vector<2x32xf32>
    %c8_145 = arith.constant 8 : index
    %c0_146 = arith.constant 0 : index
    %c0_147 = arith.constant 0 : index
    %193 = vector.load %arg6[%c8_145, %c0_146, %c0_147] : memref<9x32x32xf32, #tpu.memory_space<vmem>>, vector<1x32x32xf32>
    %194 = vector.shape_cast %193 : vector<1x32x32xf32> to vector<32x32xf32>
    %cst_148 = arith.constant dense<0.000000e+00> : vector<2x32xf32>
    %195 = tpu.matmul %175, %194, %cst_148 {dimension_numbers = #tpu.dot_dimension_numbers<[1], [0], [0], [1], [0, 0, 1, 1], [], []>} : vector<2x32xf32>, vector<32x32xf32>, vector<2x32xf32> -> vector<2x32xf32>
    %c8_149 = arith.constant 8 : index
    %c0_150 = arith.constant 0 : index
    %c0_151 = arith.constant 0 : index
    %196 = vector.load %arg8[%c8_149, %c0_150, %c0_151] : memref<9x1x32xf32, #tpu.memory_space<vmem>>, vector<1x1x32xf32>
    %197 = vector.shape_cast %196 : vector<1x1x32xf32> to vector<1x32xf32>
    %198 = vector.broadcast %197 : vector<1x32xf32> to vector<2x32xf32>
    %199 = arith.addf %195, %198 : vector<2x32xf32>
    %200 = arith.addf %185, %76 : vector<2x32xf32>
    %201 = arith.negf %200 : vector<2x32xf32>
    %202 = math.exp %201 : vector<2x32xf32>
    %cst_152 = arith.constant 1.000000e+00 : f32
    %203 = vector.broadcast %cst_152 : f32 to vector<2x32xf32>
    %204 = arith.addf %203, %202 : vector<2x32xf32>
    %205 = arith.divf %203, %204 : vector<2x32xf32>
    %206 = arith.addf %192, %83 : vector<2x32xf32>
    %207 = arith.negf %206 : vector<2x32xf32>
    %208 = math.exp %207 : vector<2x32xf32>
    %cst_153 = arith.constant 1.000000e+00 : f32
    %209 = vector.broadcast %cst_153 : f32 to vector<2x32xf32>
    %210 = arith.addf %209, %208 : vector<2x32xf32>
    %211 = arith.divf %209, %210 : vector<2x32xf32>
    %212 = arith.mulf %205, %90 : vector<2x32xf32>
    %213 = arith.addf %199, %212 : vector<2x32xf32>
    %214 = math.tanh %213 : vector<2x32xf32>
    %cst_154 = arith.constant 1.000000e+00 : f32
    %215 = vector.broadcast %cst_154 : f32 to vector<2x32xf32>
    %216 = arith.subf %215, %211 : vector<2x32xf32>
    %217 = arith.mulf %216, %214 : vector<2x32xf32>
    %218 = arith.mulf %211, %27 : vector<2x32xf32>
    %219 = arith.addf %217, %218 : vector<2x32xf32>
    %c2_155 = arith.constant 2 : index
    %c0_156 = arith.constant 0 : index
    %c0_157 = arith.constant 0 : index
    %220 = vector.load %arg13[%c2_155, %c0_156, %c0_157] : memref<3x2x32xf32, #tpu.memory_space<vmem>>, vector<1x2x32xf32>
    %221 = vector.shape_cast %220 : vector<1x2x32xf32> to vector<2x32xf32>
    %222 = vector.shape_cast %219 : vector<2x32xf32> to vector<1x2x32xf32>
    tpu.vector_store %arg13[%c2_155, %c0_156, %c0_157], %222 {strides = array<i32>} : memref<3x2x32xf32, #tpu.memory_space<vmem>>, vector<1x2x32xf32>,
    %c0_158 = arith.constant 0 : index
    %c0_159 = arith.constant 0 : index
    %c0_160 = arith.constant 0 : index
    %223 = vector.load %arg10[%c0_158, %c0_159, %c0_160] : memref<3x32x16xf32, #tpu.memory_space<vmem>>, vector<1x32x16xf32>
    %224 = vector.shape_cast %223 : vector<1x32x16xf32> to vector<32x16xf32>
    %cst_161 = arith.constant dense<0.000000e+00> : vector<2x16xf32>
    %225 = tpu.matmul %131, %224, %cst_161 {dimension_numbers = #tpu.dot_dimension_numbers<[1], [0], [0], [1], [0, 0, 1, 1], [], []>} : vector<2x32xf32>, vector<32x16xf32>, vector<2x16xf32> -> vector<2x16xf32>
    %c1_162 = arith.constant 1 : index
    %c0_163 = arith.constant 0 : index
    %c0_164 = arith.constant 0 : index
    %226 = vector.load %arg10[%c1_162, %c0_163, %c0_164] : memref<3x32x16xf32, #tpu.memory_space<vmem>>, vector<1x32x16xf32>
    %227 = vector.shape_cast %226 : vector<1x32x16xf32> to vector<32x16xf32>
    %cst_165 = arith.constant dense<0.000000e+00> : vector<2x16xf32>
    %228 = tpu.matmul %175, %227, %cst_165 {dimension_numbers = #tpu.dot_dimension_numbers<[1], [0], [0], [1], [0, 0, 1, 1], [], []>} : vector<2x32xf32>, vector<32x16xf32>, vector<2x16xf32> -> vector<2x16xf32>
    %229 = arith.addf %225, %228 : vector<2x16xf32>
    %c2_166 = arith.constant 2 : index
    %c0_167 = arith.constant 0 : index
    %c0_168 = arith.constant 0 : index
    %230 = vector.load %arg10[%c2_166, %c0_167, %c0_168] : memref<3x32x16xf32, #tpu.memory_space<vmem>>, vector<1x32x16xf32>
    %231 = vector.shape_cast %230 : vector<1x32x16xf32> to vector<32x16xf32>
    %cst_169 = arith.constant dense<0.000000e+00> : vector<2x16xf32>
    %232 = tpu.matmul %219, %231, %cst_169 {dimension_numbers = #tpu.dot_dimension_numbers<[1], [0], [0], [1], [0, 0, 1, 1], [], []>} : vector<2x32xf32>, vector<32x16xf32>, vector<2x16xf32> -> vector<2x16xf32>
    %233 = arith.addf %229, %232 : vector<2x16xf32>
    %c0_170 = arith.constant 0 : index
    %c0_171 = arith.constant 0 : index
    %234 = vector.load %arg11[%c0_170, %c0_171] : memref<1x16xf32, #tpu.memory_space<vmem>>, vector<1x16xf32>
    %235 = vector.broadcast %234 : vector<1x16xf32> to vector<2x16xf32>
    %236 = arith.addf %233, %235 : vector<2x16xf32>
    %c0_172 = arith.constant 0 : index
    %c0_173 = arith.constant 0 : index
    %c0_174 = arith.constant 0 : index
    %237 = vector.load %arg12[%c0_172, %c0_173, %c0_174] : memref<1x2x16xf32, #tpu.memory_space<vmem>>, vector<1x2x16xf32>
    %238 = vector.shape_cast %237 : vector<1x2x16xf32> to vector<2x16xf32>
    %239 = vector.shape_cast %236 : vector<2x16xf32> to vector<1x2x16xf32>
    tpu.vector_store %arg12[%c0_172, %c0_173, %c0_174], %239 {strides = array<i32>} : memref<1x2x16xf32, #tpu.memory_space<vmem>>, vector<1x2x16xf32>,
    return
  }
  func.func @transform_0(%arg0: i32) -> (i32, i32, i32) {
    %c0_i32 = arith.constant 0 : i32
    %c0_i32_0 = arith.constant 0 : i32
    %c0_i32_1 = arith.constant 0 : i32
    return %arg0, %c0_i32, %c0_i32_0 : i32, i32, i32
  }
  func.func @transform_1(%arg0: i32) -> (i32, i32, i32) {
    %c0_i32 = arith.constant 0 : i32
    %c0_i32_0 = arith.constant 0 : i32
    %c0_i32_1 = arith.constant 0 : i32
    return %arg0, %c0_i32, %c0_i32_0 : i32, i32, i32
  }
  func.func @transform_2(%arg0: i32) -> (i32, i32, i32) {
    %c0_i32 = arith.constant 0 : i32
    %c0_i32_0 = arith.constant 0 : i32
    %c0_i32_1 = arith.constant 0 : i32
    %c0_i32_2 = arith.constant 0 : i32
    return %c0_i32, %c0_i32_0, %c0_i32_1 : i32, i32, i32
  }
  func.func @transform_3(%arg0: i32) -> (i32, i32) {
    %c0_i32 = arith.constant 0 : i32
    %c0_i32_0 = arith.constant 0 : i32
    %c0_i32_1 = arith.constant 0 : i32
    return %c0_i32, %c0_i32_0 : i32, i32
  }
  func.func @transform_4(%arg0: i32) -> (i32, i32) {
    %c0_i32 = arith.constant 0 : i32
    %c0_i32_0 = arith.constant 0 : i32
    %c0_i32_1 = arith.constant 0 : i32
    return %c0_i32, %c0_i32_0 : i32, i32
  }
  func.func @transform_5(%arg0: i32) -> (i32, i32, i32) {
    %c0_i32 = arith.constant 0 : i32
    %c0_i32_0 = arith.constant 0 : i32
    %c0_i32_1 = arith.constant 0 : i32
    %c0_i32_2 = arith.constant 0 : i32
    return %c0_i32, %c0_i32_0, %c0_i32_1 : i32, i32, i32
  }
  func.func @transform_6(%arg0: i32) -> (i32, i32, i32) {
    %c0_i32 = arith.constant 0 : i32
    %c0_i32_0 = arith.constant 0 : i32
    %c0_i32_1 = arith.constant 0 : i32
    %c0_i32_2 = arith.constant 0 : i32
    return %c0_i32, %c0_i32_0, %c0_i32_1 : i32, i32, i32
  }
  func.func @transform_7(%arg0: i32) -> (i32, i32, i32) {
    %c0_i32 = arith.constant 0 : i32
    %c0_i32_0 = arith.constant 0 : i32
    %c0_i32_1 = arith.constant 0 : i32
    %c0_i32_2 = arith.constant 0 : i32
    return %c0_i32, %c0_i32_0, %c0_i32_1 : i32, i32, i32
  }
  func.func @transform_8(%arg0: i32) -> (i32, i32, i32) {
    %c0_i32 = arith.constant 0 : i32
    %c0_i32_0 = arith.constant 0 : i32
    %c0_i32_1 = arith.constant 0 : i32
    %c0_i32_2 = arith.constant 0 : i32
    return %c0_i32, %c0_i32_0, %c0_i32_1 : i32, i32, i32
  }
  func.func @transform_9(%arg0: i32) -> (i32, i32, i32) {
    %c0_i32 = arith.constant 0 : i32
    %c0_i32_0 = arith.constant 0 : i32
    %c0_i32_1 = arith.constant 0 : i32
    %c0_i32_2 = arith.constant 0 : i32
    return %c0_i32, %c0_i32_0, %c0_i32_1 : i32, i32, i32
  }
  func.func @transform_10(%arg0: i32) -> (i32, i32) {
    %c0_i32 = arith.constant 0 : i32
    %c0_i32_0 = arith.constant 0 : i32
    %c0_i32_1 = arith.constant 0 : i32
    return %c0_i32, %c0_i32_0 : i32, i32
  }
  func.func @transform_11(%arg0: i32) -> (i32, i32, i32) {
    %c0_i32 = arith.constant 0 : i32
    %c0_i32_0 = arith.constant 0 : i32
    %c0_i32_1 = arith.constant 0 : i32
    return %arg0, %c0_i32, %c0_i32_0 : i32, i32, i32
  }
  func.func @transform_12(%arg0: i32) -> (i32, i32, i32) {
    %c0_i32 = arith.constant 0 : i32
    %c0_i32_0 = arith.constant 0 : i32
    %c0_i32_1 = arith.constant 0 : i32
    %c0_i32_2 = arith.constant 0 : i32
    return %c0_i32, %c0_i32_0, %c0_i32_1 : i32, i32, i32
  }
}

</mosaic_0001>

<llo_original>
// kernel: _forward_seq_impl.1
$region0: #{_forward_seq_impl.1}
  #allocation0 [shape = 'u32[]', space=smem, size = 0x4, offset = 0x4, fixed_abs, tag = 'smem constant byte address 0x4 - core index']
  #allocation1 [shape = 'u32[144,128]{1,0:T(1,128)}', space=vmem, size = 0x12000, scoped, tag = 'internal scratch']
  %s0 = inlined_call_operand.vmem [shape: s32[1,2,1], index: 0, kind: input, shape index: {}]
  %s1 = inlined_call_operand.vmem [shape: f32[1,2,5], index: 1, kind: input, shape index: {}]
  %s2 = inlined_call_operand.hbm [shape: f32[3,2,32], index: 2, kind: input, shape index: {}, may-alias: {2,12}]
  %s3 = inlined_call_operand.vmem [shape: f32[16,32], index: 3, kind: input, shape index: {}]
  %s4 = inlined_call_operand.vmem [shape: f32[5,32], index: 4, kind: input, shape index: {}]
  %s5 = inlined_call_operand.hbm [shape: f32[9,32,32], index: 5, kind: input, shape index: {}]
  %s6 = inlined_call_operand.hbm [shape: f32[9,32,32], index: 6, kind: input, shape index: {}]
  %s7 = inlined_call_operand.vmem [shape: f32[9,1,32], index: 7, kind: input, shape index: {}]
  %s8 = inlined_call_operand.vmem [shape: f32[9,1,32], index: 8, kind: input, shape index: {}]
  %s9 = inlined_call_operand.vmem [shape: f32[3,32,16], index: 9, kind: input, shape index: {}]
  %s10 = inlined_call_operand.vmem [shape: f32[1,16], index: 10, kind: input, shape index: {}]
  %s11 = inlined_call_operand.hbm [shape: f32[1,2,16], index: 11, kind: output, shape index: {0}]
  %s12 = inlined_call_operand.hbm [shape: f32[3,2,32], index: 12, kind: output, shape index: {1}, may-alias: {2,12}]
  %13 = xla_tuple %s11, %s12
  %s14 = sld [smem:[#allocation0]]
  $region78: #{_forward_seq_impl.1} parent=0
    _
  %s16 = ssub.s32 1, %s14
  %s17 = scalar_select 0, %s16, %s14
  $region1: #{_forward_seq_impl.1} parent=0
    #allocation2 [shape = 'u8[3072]{0}', space=vmem, size = 0xc00, scoped, tag = 'input window, operand 2, single buffered']
    #allocation3 [shape = 's32[1]{0}', space=sflag, size = 0x4, scoped, tag = 'scoped memory for _forward_seq_impl.1']
    #allocation4 [shape = 's32[1]{0}', space=sflag, size = 0x4, scoped, tag = 'scoped memory for _forward_seq_impl.1']
    #allocation5 [shape = 'u8[147456]{0}', space=vmem, size = 0x24000, scoped, tag = 'input window, operand 5, single buffered']
    #allocation6 [shape = 's32[1]{0}', space=sflag, size = 0x4, scoped, tag = 'scoped memory for _forward_seq_impl.1']
    #allocation7 [shape = 'u8[147456]{0}', space=vmem, size = 0x24000, scoped, tag = 'input window, operand 6, single buffered']
    #allocation8 [shape = 'u8[1024]{0}', space=vmem, size = 0x400, scoped, tag = 'output window, operand 0, single buffered']
    #allocation9 [shape = 'u8[3072]{0}', space=vmem, size = 0xc00, scoped, tag = 'output window, operand 1, single buffered']
    #allocation10 [shape = 's32[1]{0}', space=sflag, size = 0x4, scoped, tag = 'scoped memory for _forward_seq_impl.1']
    %18 = vsyncpa [#allocation3], 0
    %19 = vsyncpa [#allocation6], 0
    %20 = vsyncpa [#allocation4], 0
    %21 = vsyncpa [#allocation10], 0
    // Predicated region
    $region2: #{_forward_seq_impl.1} parent=1 // pred_check
      _
    $region3: #{_forward_seq_impl.1} parent=1 // pred_check_branch
      %23 = sbr.rel (0) target = $region5
    $region4: #{_forward_seq_impl.1} parent=1 // pred_region
      _
    $region5: #{_forward_seq_impl.1} parent=1 // pred_fallthru
      _
    // Predicated region
    $region6: #{_forward_seq_impl.1} parent=1 // pred_check
      _
    $region7: #{_forward_seq_impl.1} parent=1 // pred_check_branch
      %25 = sbr.rel (0) target = $region9
    $region8: #{_forward_seq_impl.1} parent=1 // pred_region
      _
    $region9: #{_forward_seq_impl.1} parent=1 // pred_fallthru
      _
    // Predicated region
    $region10: #{_forward_seq_impl.1} parent=1 // pred_check
      _
    $region11: #{_forward_seq_impl.1} parent=1 // pred_check_branch
      %27 = sbr.rel (0) target = $region13
    $region12: #{_forward_seq_impl.1} parent=1 // pred_region
      %s29 = ssub.s32 96, 96
      %30 = vsyncadd [#allocation3], %s29
      %s31 = sshll.u32 [#allocation2], 4
      %s32 = int_to_ptr.vmem [resolvable:$true] %s31
      %37 = dma.hbm_to_vmem [thread:$0]  %s2, 96, %s32, [#allocation3], 32, 32, 2
    $region13: #{_forward_seq_impl.1} parent=1 // pred_fallthru
      _
    // Predicated region
    $region14: #{_forward_seq_impl.1} parent=1 // pred_check
      _
    $region15: #{_forward_seq_impl.1} parent=1 // pred_check_branch
      %39 = sbr.rel (0) target = $region17
    $region16: #{_forward_seq_impl.1} parent=1 // pred_region
      _
    $region17: #{_forward_seq_impl.1} parent=1 // pred_fallthru
      _
    // Predicated region
    $region18: #{_forward_seq_impl.1} parent=1 // pred_check
      _
    $region19: #{_forward_seq_impl.1} parent=1 // pred_check_branch
      %41 = sbr.rel (0) target = $region21
    $region20: #{_forward_seq_impl.1} parent=1 // pred_region
      _
    $region21: #{_forward_seq_impl.1} parent=1 // pred_fallthru
      _
    // Predicated region
    $region22: #{_forward_seq_impl.1} parent=1 // pred_check
      _
    $region23: #{_forward_seq_impl.1} parent=1 // pred_check_branch
      %43 = sbr.rel (0) target = $region25
    $region24: #{_forward_seq_impl.1} parent=1 // pred_region
      %s45 = ssub.s32 4608, 4608
      %46 = vsyncadd [#allocation6], %s45
      %s47 = sshll.u32 [#allocation5], 4
      %s48 = int_to_ptr.vmem [resolvable:$true] %s47
      %53 = dma.hbm_to_vmem [thread:$0]  %s5, 4608, %s48, [#allocation6], 128, 128, 8
    $region25: #{_forward_seq_impl.1} parent=1 // pred_fallthru
      _
    // Predicated region
    $region26: #{_forward_seq_impl.1} parent=1 // pred_check
      _
    $region27: #{_forward_seq_impl.1} parent=1 // pred_check_branch
      %55 = sbr.rel (0) target = $region29
    $region28: #{_forward_seq_impl.1} parent=1 // pred_region
      %s57 = ssub.s32 4608, 4608
      %58 = vsyncadd [#allocation6], %s57
      %s59 = sshll.u32 [#allocation7], 4
      %s60 = int_to_ptr.vmem [resolvable:$true] %s59
      %65 = dma.hbm_to_vmem [thread:$0]  %s6, 4608, %s60, [#allocation6], 128, 128, 8
    $region29: #{_forward_seq_impl.1} parent=1 // pred_fallthru
      _
    // Predicated region
    $region30: #{_forward_seq_impl.1} parent=1 // pred_check
      _
    $region31: #{_forward_seq_impl.1} parent=1 // pred_check_branch
      %67 = sbr.rel (0) target = $region33
    $region32: #{_forward_seq_impl.1} parent=1 // pred_region
      _
    $region33: #{_forward_seq_impl.1} parent=1 // pred_fallthru
      _
    // Predicated region
    $region34: #{_forward_seq_impl.1} parent=1 // pred_check
      _
    $region35: #{_forward_seq_impl.1} parent=1 // pred_check_branch
      %69 = sbr.rel (0) target = $region37
    $region36: #{_forward_seq_impl.1} parent=1 // pred_region
      _
    $region37: #{_forward_seq_impl.1} parent=1 // pred_fallthru
      _
    // Predicated region
    $region38: #{_forward_seq_impl.1} parent=1 // pred_check
      _
    $region39: #{_forward_seq_impl.1} parent=1 // pred_check_branch
      %71 = sbr.rel (0) target = $region41
    $region40: #{_forward_seq_impl.1} parent=1 // pred_region
      _
    $region41: #{_forward_seq_impl.1} parent=1 // pred_fallthru
      _
    // Predicated region
    $region42: #{_forward_seq_impl.1} parent=1 // pred_check
      _
    $region43: #{_forward_seq_impl.1} parent=1 // pred_check_branch
      %73 = sbr.rel (0) target = $region45
    $region44: #{_forward_seq_impl.1} parent=1 // pred_region
      _
    $region45: #{_forward_seq_impl.1} parent=1 // pred_fallthru
      _
    // Predicated region
    $region46: #{_forward_seq_impl.1} parent=1 // pred_check
      _
    $region47: #{_forward_seq_impl.1} parent=1 // pred_check_branch
      %75 = sbr.rel (0) target = $region49
    $region48: #{_forward_seq_impl.1} parent=1 // pred_region
      %76 = dma.done [#allocation3], 96
    $region49: #{_forward_seq_impl.1} parent=1 // pred_fallthru
      _
    // Predicated region
    $region50: #{_forward_seq_impl.1} parent=1 // pred_check
      _
    $region51: #{_forward_seq_impl.1} parent=1 // pred_check_branch
      %78 = sbr.rel (0) target = $region53
    $region52: #{_forward_seq_impl.1} parent=1 // pred_region
      %79 = dma.done [#allocation6], 4608
    $region53: #{_forward_seq_impl.1} parent=1 // pred_fallthru
      _
    // Predicated region
    $region54: #{_forward_seq_impl.1} parent=1 // pred_check
      _
    $region55: #{_forward_seq_impl.1} parent=1 // pred_check_branch
      %81 = sbr.rel (0) target = $region57
    $region56: #{_forward_seq_impl.1} parent=1 // pred_region
      %82 = dma.done [#allocation6], 4608
    $region57: #{_forward_seq_impl.1} parent=1 // pred_fallthru
      _
    %p83 = scmp.eq.s32.totalorder 0, 0
    // Predicated region
    $region58: #{_forward_seq_impl.1} parent=1 // pred_check
      %p84 = pneg %p83
    $region59: #{_forward_seq_impl.1} parent=1 // pred_check_branch
      %86 = sbr.rel (%p84) target = $region61
    $region60: #{_forward_seq_impl.1} parent=1 // pred_region
      %v87 = vld [vmem:[#allocation2] sm:$0x3]
      %v88 = vld [vmem:[#allocation2 + $0x2] sm:$0x3]
      %v89 = vld [vmem:[#allocation2 + $0x4] sm:$0x3]
      %vm90 = vcmask 254976
      %91 = vst.msk [vmem:[#allocation9] sm:$0x3] %vm90, %v87
      %92 = vst.msk [vmem:[#allocation9 + $0x2] sm:$0x3] %vm90, %v88
      %93 = vst.msk [vmem:[#allocation9 + $0x4] sm:$0x3] %vm90, %v89
    $region61: #{_forward_seq_impl.1} parent=1 // pred_fallthru
      _
    %v94 = vld [vmem:[%s0] sm:$0x3]
    %v95 = vlaneseq
    %v96 = vand.u32 %v95, 127
    %97 = vset.pattern.permute.xlu0 0
    %98 = vperm.xlu0 %97, %v94
    %v99 = vpop.permute.xlu0 %98
    %vm100 = vcmp.eq.s32.totalorder %v96, %v99
    %v101 = vsel %vm100, 1, 0
    %v102 = vcvt.s32.f32 %v101
    %v103 = vld [vmem:[%s3] sm:$0xff]
    %v104 = vld [vmem:[%s3 + $0x8] sm:$0xff]
    %v105 = vld [vmem:[%s1] sm:$0x3]
    %v106 = vld [vmem:[%s4] sm:$0x1f]
    %vm107 = vcmask 39936
    %v109 = vsel %vm107, %v105, 0
    %vm111 = vcmask 1044480
    %v113 = vsel %vm111, %v106, 0
    %115 = vmatprep.subr.mxu0 0.0
    %116 = vmatpush1.msra.mxu0 %v113
    %117 = vmatprep.subr.mxu0 0.0
    %118 = vmatpush1.msra.mxu0 0.0
    %119 = vmatprep.subr.mxu0 0.0
    %120 = vmatpush1.msra.mxu0 0.0
    %121 = vmatprep.subr.mxu0 0.0
    %122 = vmatpush1.msra.mxu0 0.0
    %123 = vmatprep.subr.mxu0 0.0
    %124 = vmatpush1.msra.mxu0 0.0
    %125 = vmatprep.subr.mxu0 0.0
    %126 = vmatpush1.msra.mxu0 0.0
    %127 = vmatprep.subr.mxu0 0.0
    %128 = vmatpush1.msra.mxu0 0.0
    %129 = vmatprep.subr.mxu0 0.0
    %130 = vmatpush1.msra.mxu0 0.0
    %131 = vmatprep.subr.mxu0 0.0
    %132 = vmatpush1.msra.mxu0 0.0
    %133 = vmatprep.subr.mxu0 0.0
    %134 = vmatpush1.msra.mxu0 0.0
    %135 = vmatprep.subr.mxu0 0.0
    %136 = vmatpush1.msra.mxu0 0.0
    %137 = vmatprep.subr.mxu0 0.0
    %138 = vmatpush1.msra.mxu0 0.0
    %139 = vmatprep.subr.mxu0 0.0
    %140 = vmatpush1.msra.mxu0 0.0
    %141 = vmatprep.subr.mxu0 0.0
    %142 = vmatpush1.msra.mxu0 0.0
    %143 = vmatprep.subr.mxu0 0.0
    %144 = vmatpush1.msra.mxu0 0.0
    %145 = vmatprep.subr.mxu0 0.0
    %146 = vmatpush1.msra.mxu0 0.0
    %147 = vmatprep.subr.mxu0 0.0
    %148 = vmatpush1.msra.mxu0 0.0
    %149 = vmatprep.subr.mxu0 0.0
    %150 = vmatpush1.msra.mxu0 0.0
    %151 = vmatprep.subr.mxu0 0.0
    %152 = vmatpush1.msra.mxu0 0.0
    %153 = vmatprep.subr.mxu0 0.0
    %154 = vmatpush1.msra.mxu0 0.0
    %155 = vmatprep.subr.mxu0 0.0
    %156 = vmatpush1.msra.mxu0 0.0
    %157 = vmatprep.subr.mxu0 0.0
    %158 = vmatpush1.msra.mxu0 0.0
    %159 = vmatprep.subr.mxu0 0.0
    %160 = vmatpush1.msra.mxu0 0.0
    %161 = vmatprep.subr.mxu0 0.0
    %162 = vmatpush1.msra.mxu0 0.0
    %163 = vmatprep.subr.mxu0 0.0
    %164 = vmatpush1.msra.mxu0 0.0
    %165 = vmatprep.subr.mxu0 0.0
    %166 = vmatpush1.msra.mxu0 0.0
    %167 = vmatprep.subr.mxu0 0.0
    %168 = vmatpush1.msra.mxu0 0.0
    %169 = vmatprep.subr.mxu0 0.0
    %170 = vmatpush1.msra.mxu0 0.0
    %171 = vmatprep.subr.mxu0 0.0
    %172 = vmatpush1.msra.mxu0 0.0
    %173 = vmatprep.subr.mxu0 0.0
    %174 = vmatpush1.msra.mxu0 0.0
    %175 = vmatprep.subr.mxu0 0.0
    %176 = vmatpush1.msra.mxu0 0.0
    %177 = vmatprep.subr.mxu0 0.0
    %178 = vmatpush1.msra.mxu0 0.0
    %179 = vmatprep.mubr.f32.mxu0 0.0
    %180 = vmatmul.mubr.f32.gmra.mrb[0].mxu0 %v109
    %v181 = vpop.f32.mrb[0].mxu0
    %v182 = vadd.f32 0.0, %v181
    %v183 = vpop.f32.mrb[0].mxu0
    %184 = vdwg.mxu0
    %vm185 = vcmask 130048
    %v187 = vsel %vm185, %v102, 0
    %189 = vmatprep.subr.mxu0 0.0
    %190 = vmatpush1.msra.mxu0 %v103
    %191 = vmatprep.subr.mxu0 0.0
    %192 = vmatpush1.msra.mxu0 %v104
    %193 = vmatprep.subr.mxu0 0.0
    %194 = vmatpush1.msra.mxu0 0.0
    %195 = vmatprep.subr.mxu0 0.0
    %196 = vmatpush1.msra.mxu0 0.0
    %197 = vmatprep.subr.mxu0 0.0
    %198 = vmatpush1.msra.mxu0 0.0
    %199 = vmatprep.subr.mxu0 0.0
    %200 = vmatpush1.msra.mxu0 0.0
    %201 = vmatprep.subr.mxu0 0.0
    %202 = vmatpush1.msra.mxu0 0.0
    %203 = vmatprep.subr.mxu0 0.0
    %204 = vmatpush1.msra.mxu0 0.0
    %205 = vmatprep.subr.mxu0 0.0
    %206 = vmatpush1.msra.mxu0 0.0
    %207 = vmatprep.subr.mxu0 0.0
    %208 = vmatpush1.msra.mxu0 0.0
    %209 = vmatprep.subr.mxu0 0.0
    %210 = vmatpush1.msra.mxu0 0.0
    %211 = vmatprep.subr.mxu0 0.0
    %212 = vmatpush1.msra.mxu0 0.0
    %213 = vmatprep.subr.mxu0 0.0
    %214 = vmatpush1.msra.mxu0 0.0
    %215 = vmatprep.subr.mxu0 0.0
    %216 = vmatpush1.msra.mxu0 0.0
    %217 = vmatprep.subr.mxu0 0.0
    %218 = vmatpush1.msra.mxu0 0.0
    %219 = vmatprep.subr.mxu0 0.0
    %220 = vmatpush1.msra.mxu0 0.0
    %221 = vmatprep.subr.mxu0 0.0
    %222 = vmatpush1.msra.mxu0 0.0
    %223 = vmatprep.subr.mxu0 0.0
    %224 = vmatpush1.msra.mxu0 0.0
    %225 = vmatprep.subr.mxu0 0.0
    %226 = vmatpush1.msra.mxu0 0.0
    %227 = vmatprep.subr.mxu0 0.0
    %228 = vmatpush1.msra.mxu0 0.0
    %229 = vmatprep.subr.mxu0 0.0
    %230 = vmatpush1.msra.mxu0 0.0
    %231 = vmatprep.subr.mxu0 0.0
    %232 = vmatpush1.msra.mxu0 0.0
    %233 = vmatprep.subr.mxu0 0.0
    %234 = vmatpush1.msra.mxu0 0.0
    %235 = vmatprep.subr.mxu0 0.0
    %236 = vmatpush1.msra.mxu0 0.0
    %237 = vmatprep.subr.mxu0 0.0
    %238 = vmatpush1.msra.mxu0 0.0
    %239 = vmatprep.subr.mxu0 0.0
    %240 = vmatpush1.msra.mxu0 0.0
    %241 = vmatprep.subr.mxu0 0.0
    %242 = vmatpush1.msra.mxu0 0.0
    %243 = vmatprep.subr.mxu0 0.0
    %244 = vmatpush1.msra.mxu0 0.0
    %245 = vmatprep.subr.mxu0 0.0
    %246 = vmatpush1.msra.mxu0 0.0
    %247 = vmatprep.subr.mxu0 0.0
    %248 = vmatpush1.msra.mxu0 0.0
    %249 = vmatprep.subr.mxu0 0.0
    %250 = vmatpush1.msra.mxu0 0.0
    %251 = vmatprep.subr.mxu0 0.0
    %252 = vmatpush1.msra.mxu0 0.0
    %253 = vmatprep.mubr.f32.mxu0 0.0
    %254 = vmatmul.mubr.f32.gmra.mrb[0].mxu0 %v187
    %v255 = vpop.f32.mrb[0].mxu0
    %v256 = vadd.f32 %v182, %v255
    %v257 = vpop.f32.mrb[0].mxu0
    %258 = vdwg.mxu0
    %vm259 = vcmp.ge.f32.partialorder %v256, 0.0
    %v260 = vmul.f32 %v256, 0.1
    %v261 = vsel %vm259, %v256, %v260
    %v262 = vld [vmem:[#allocation9] sm:$0x3]
    %s263 = scalar_lea.vmem [#allocation9], 2
    %v264 = vld [vmem:[%s263] sm:$0x3]
    %s265 = scalar_lea.vmem [#allocation9], 4
    %v266 = vld [vmem:[%s265] sm:$0x3]
    %v267 = vld [vmem:[#allocation7] sm:$0xff]
    %v268 = vld [vmem:[#allocation7 + $0x8] sm:$0xff]
    %v269 = vld [vmem:[#allocation7 + $0x10] sm:$0xff]
    %v270 = vld [vmem:[#allocation7 + $0x18] sm:$0xff]
    %v271 = vld [vmem:[%s8] sm:$0x1]
    %v273 = vlaneseq
    %v274 = vshrl.u32 %v273, 7
    %v275 = vsub.s32 0, %v274
    %v276 = vrot.slane %v271, %v275
    %vm278 = vcmask 261120
    %v280 = vsel %vm278, %v262, 0
    %282 = vmatprep.subr.mxu0 0.0
    %283 = vmatpush1.msra.mxu0 %v267
    %284 = vmatprep.subr.mxu0 0.0
    %285 = vmatpush1.msra.mxu0 %v268
    %286 = vmatprep.subr.mxu0 0.0
    %287 = vmatpush1.msra.mxu0 %v269
    %288 = vmatprep.subr.mxu0 0.0
    %289 = vmatpush1.msra.mxu0 %v270
    %290 = vmatprep.subr.mxu0 0.0
    %291 = vmatpush1.msra.mxu0 0.0
    %292 = vmatprep.subr.mxu0 0.0
    %293 = vmatpush1.msra.mxu0 0.0
    %294 = vmatprep.subr.mxu0 0.0
    %295 = vmatpush1.msra.mxu0 0.0
    %296 = vmatprep.subr.mxu0 0.0
    %297 = vmatpush1.msra.mxu0 0.0
    %298 = vmatprep.subr.mxu0 0.0
    %299 = vmatpush1.msra.mxu0 0.0
    %300 = vmatprep.subr.mxu0 0.0
    %301 = vmatpush1.msra.mxu0 0.0
    %302 = vmatprep.subr.mxu0 0.0
    %303 = vmatpush1.msra.mxu0 0.0
    %304 = vmatprep.subr.mxu0 0.0
    %305 = vmatpush1.msra.mxu0 0.0
    %306 = vmatprep.subr.mxu0 0.0
    %307 = vmatpush1.msra.mxu0 0.0
    %308 = vmatprep.subr.mxu0 0.0
    %309 = vmatpush1.msra.mxu0 0.0
    %310 = vmatprep.subr.mxu0 0.0
    %311 = vmatpush1.msra.mxu0 0.0
    %312 = vmatprep.subr.mxu0 0.0
    %313 = vmatpush1.msra.mxu0 0.0
    %314 = vmatprep.subr.mxu0 0.0
    %315 = vmatpush1.msra.mxu0 0.0
    %316 = vmatprep.subr.mxu0 0.0
    %317 = vmatpush1.msra.mxu0 0.0
    %318 = vmatprep.subr.mxu0 0.0
    %319 = vmatpush1.msra.mxu0 0.0
    %320 = vmatprep.subr.mxu0 0.0
    %321 = vmatpush1.msra.mxu0 0.0
    %322 = vmatprep.subr.mxu0 0.0
    %323 = vmatpush1.msra.mxu0 0.0
    %324 = vmatprep.subr.mxu0 0.0
    %325 = vmatpush1.msra.mxu0 0.0
    %326 = vmatprep.subr.mxu0 0.0
    %327 = vmatpush1.msra.mxu0 0.0
    %328 = vmatprep.subr.mxu0 0.0
    %329 = vmatpush1.msra.mxu0 0.0
    %330 = vmatprep.subr.mxu0 0.0
    %331 = vmatpush1.msra.mxu0 0.0
    %332 = vmatprep.subr.mxu0 0.0
    %333 = vmatpush1.msra.mxu0 0.0
    %334 = vmatprep.subr.mxu0 0.0
    %335 = vmatpush1.msra.mxu0 0.0
    %336 = vmatprep.subr.mxu0 0.0
    %337 = vmatpush1.msra.mxu0 0.0
    %338 = vmatprep.subr.mxu0 0.0
    %339 = vmatpush1.msra.mxu0 0.0
    %340 = vmatprep.subr.mxu0 0.0
    %341 = vmatpush1.msra.mxu0 0.0
    %342 = vmatprep.subr.mxu0 0.0
    %343 = vmatpush1.msra.mxu0 0.0
    %344 = vmatprep.subr.mxu0 0.0
    %345 = vmatpush1.msra.mxu0 0.0
    %346 = vmatprep.mubr.f32.mxu0 0.0
    %347 = vmatmul.mubr.f32.gmra.mrb[0].mxu0 %v280
    %v348 = vpop.f32.mrb[0].mxu0
    %v349 = vadd.f32 %v276, %v348
    %v350 = vpop.f32.mrb[0].mxu0
    %351 = vdwg.mxu0
    %s352 = scalar_lea.vmem [#allocation7], 32
    %v353 = vld [vmem:[%s352] sm:$0xff]
    %v354 = vld [vmem:[%s352 + $0x8] sm:$0xff]
    %v355 = vld [vmem:[%s352 + $0x10] sm:$0xff]
    %v356 = vld [vmem:[%s352 + $0x18] sm:$0xff]
    %s357 = scalar_lea.vmem %s8, 1
    %v358 = vld [vmem:[%s357] sm:$0x1]
    %v360 = vlaneseq
    %v361 = vshrl.u32 %v360, 7
    %v362 = vsub.s32 0, %v361
    %v363 = vrot.slane %v358, %v362
    %365 = vmatprep.subr.mxu0 0.0
    %366 = vmatpush1.msra.mxu0 %v353
    %367 = vmatprep.subr.mxu0 0.0
    %368 = vmatpush1.msra.mxu0 %v354
    %369 = vmatprep.subr.mxu0 0.0
    %370 = vmatpush1.msra.mxu0 %v355
    %371 = vmatprep.subr.mxu0 0.0
    %372 = vmatpush1.msra.mxu0 %v356
    %373 = vmatprep.subr.mxu0 0.0
    %374 = vmatpush1.msra.mxu0 0.0
    %375 = vmatprep.subr.mxu0 0.0
    %376 = vmatpush1.msra.mxu0 0.0
    %377 = vmatprep.subr.mxu0 0.0
    %378 = vmatpush1.msra.mxu0 0.0
    %379 = vmatprep.subr.mxu0 0.0
    %380 = vmatpush1.msra.mxu0 0.0
    %381 = vmatprep.subr.mxu0 0.0
    %382 = vmatpush1.msra.mxu0 0.0
    %383 = vmatprep.subr.mxu0 0.0
    %384 = vmatpush1.msra.mxu0 0.0
    %385 = vmatprep.subr.mxu0 0.0
    %386 = vmatpush1.msra.mxu0 0.0
    %387 = vmatprep.subr.mxu0 0.0
    %388 = vmatpush1.msra.mxu0 0.0
    %389 = vmatprep.subr.mxu0 0.0
    %390 = vmatpush1.msra.mxu0 0.0
    %391 = vmatprep.subr.mxu0 0.0
    %392 = vmatpush1.msra.mxu0 0.0
    %393 = vmatprep.subr.mxu0 0.0
    %394 = vmatpush1.msra.mxu0 0.0
    %395 = vmatprep.subr.mxu0 0.0
    %396 = vmatpush1.msra.mxu0 0.0
    %397 = vmatprep.subr.mxu0 0.0
    %398 = vmatpush1.msra.mxu0 0.0
    %399 = vmatprep.subr.mxu0 0.0
    %400 = vmatpush1.msra.mxu0 0.0
    %401 = vmatprep.subr.mxu0 0.0
    %402 = vmatpush1.msra.mxu0 0.0
    %403 = vmatprep.subr.mxu0 0.0
    %404 = vmatpush1.msra.mxu0 0.0
    %405 = vmatprep.subr.mxu0 0.0
    %406 = vmatpush1.msra.mxu0 0.0
    %407 = vmatprep.subr.mxu0 0.0
    %408 = vmatpush1.msra.mxu0 0.0
    %409 = vmatprep.subr.mxu0 0.0
    %410 = vmatpush1.msra.mxu0 0.0
    %411 = vmatprep.subr.mxu0 0.0
    %412 = vmatpush1.msra.mxu0 0.0
    %413 = vmatprep.subr.mxu0 0.0
    %414 = vmatpush1.msra.mxu0 0.0
    %415 = vmatprep.subr.mxu0 0.0
    %416 = vmatpush1.msra.mxu0 0.0
    %417 = vmatprep.subr.mxu0 0.0
    %418 = vmatpush1.msra.mxu0 0.0
    %419 = vmatprep.subr.mxu0 0.0
    %420 = vmatpush1.msra.mxu0 0.0
    %421 = vmatprep.subr.mxu0 0.0
    %422 = vmatpush1.msra.mxu0 0.0
    %423 = vmatprep.subr.mxu0 0.0
    %424 = vmatpush1.msra.mxu0 0.0
    %425 = vmatprep.subr.mxu0 0.0
    %426 = vmatpush1.msra.mxu0 0.0
    %427 = vmatprep.subr.mxu0 0.0
    %428 = vmatpush1.msra.mxu0 0.0
    %429 = vmatprep.mubr.f32.mxu0 0.0
    %430 = vmatmul.mubr.f32.gmra.mrb[0].mxu0 %v280
    %v431 = vpop.f32.mrb[0].mxu0
    %v432 = vadd.f32 %v363, %v431
    %v433 = vpop.f32.mrb[0].mxu0
    %434 = vdwg.mxu0
    %s435 = scalar_lea.vmem [#allocation7], 64
    %v436 = vld [vmem:[%s435] sm:$0xff]
    %v437 = vld [vmem:[%s435 + $0x8] sm:$0xff]
    %v438 = vld [vmem:[%s435 + $0x10] sm:$0xff]
    %v439 = vld [vmem:[%s435 + $0x18] sm:$0xff]
    %s440 = scalar_lea.vmem %s8, 2
    %v441 = vld [vmem:[%s440] sm:$0x1]
    %v443 = vlaneseq
    %v444 = vshrl.u32 %v443, 7
    %v445 = vsub.s32 0, %v444
    %v446 = vrot.slane %v441, %v445
    %448 = vmatprep.subr.mxu0 0.0
    %449 = vmatpush1.msra.mxu0 %v436
    %450 = vmatprep.subr.mxu0 0.0
    %451 = vmatpush1.msra.mxu0 %v437
    %452 = vmatprep.subr.mxu0 0.0
    %453 = vmatpush1.msra.mxu0 %v438
    %454 = vmatprep.subr.mxu0 0.0
    %455 = vmatpush1.msra.mxu0 %v439
    %456 = vmatprep.subr.mxu0 0.0
    %457 = vmatpush1.msra.mxu0 0.0
    %458 = vmatprep.subr.mxu0 0.0
    %459 = vmatpush1.msra.mxu0 0.0
    %460 = vmatprep.subr.mxu0 0.0
    %461 = vmatpush1.msra.mxu0 0.0
    %462 = vmatprep.subr.mxu0 0.0
    %463 = vmatpush1.msra.mxu0 0.0
    %464 = vmatprep.subr.mxu0 0.0
    %465 = vmatpush1.msra.mxu0 0.0
    %466 = vmatprep.subr.mxu0 0.0
    %467 = vmatpush1.msra.mxu0 0.0
    %468 = vmatprep.subr.mxu0 0.0
    %469 = vmatpush1.msra.mxu0 0.0
    %470 = vmatprep.subr.mxu0 0.0
    %471 = vmatpush1.msra.mxu0 0.0
    %472 = vmatprep.subr.mxu0 0.0
    %473 = vmatpush1.msra.mxu0 0.0
    %474 = vmatprep.subr.mxu0 0.0
    %475 = vmatpush1.msra.mxu0 0.0
    %476 = vmatprep.subr.mxu0 0.0
    %477 = vmatpush1.msra.mxu0 0.0
    %478 = vmatprep.subr.mxu0 0.0
    %479 = vmatpush1.msra.mxu0 0.0
    %480 = vmatprep.subr.mxu0 0.0
    %481 = vmatpush1.msra.mxu0 0.0
    %482 = vmatprep.subr.mxu0 0.0
    %483 = vmatpush1.msra.mxu0 0.0
    %484 = vmatprep.subr.mxu0 0.0
    %485 = vmatpush1.msra.mxu0 0.0
    %486 = vmatprep.subr.mxu0 0.0
    %487 = vmatpush1.msra.mxu0 0.0
    %488 = vmatprep.subr.mxu0 0.0
    %489 = vmatpush1.msra.mxu0 0.0
    %490 = vmatprep.subr.mxu0 0.0
    %491 = vmatpush1.msra.mxu0 0.0
    %492 = vmatprep.subr.mxu0 0.0
    %493 = vmatpush1.msra.mxu0 0.0
    %494 = vmatprep.subr.mxu0 0.0
    %495 = vmatpush1.msra.mxu0 0.0
    %496 = vmatprep.subr.mxu0 0.0
    %497 = vmatpush1.msra.mxu0 0.0
    %498 = vmatprep.subr.mxu0 0.0
    %499 = vmatpush1.msra.mxu0 0.0
    %500 = vmatprep.subr.mxu0 0.0
    %501 = vmatpush1.msra.mxu0 0.0
    %502 = vmatprep.subr.mxu0 0.0
    %503 = vmatpush1.msra.mxu0 0.0
    %504 = vmatprep.subr.mxu0 0.0
    %505 = vmatpush1.msra.mxu0 0.0
    %506 = vmatprep.subr.mxu0 0.0
    %507 = vmatpush1.msra.mxu0 0.0
    %508 = vmatprep.subr.mxu0 0.0
    %509 = vmatpush1.msra.mxu0 0.0
    %510 = vmatprep.subr.mxu0 0.0
    %511 = vmatpush1.msra.mxu0 0.0
    %512 = vmatprep.mubr.f32.mxu0 0.0
    %513 = vmatmul.mubr.f32.gmra.mrb[0].mxu0 %v280
    %v514 = vpop.f32.mrb[0].mxu0
    %v515 = vadd.f32 %v446, %v514
    %v516 = vpop.f32.mrb[0].mxu0
    %517 = vdwg.mxu0
    %s518 = scalar_lea.vmem [#allocation7], 96
    %v519 = vld [vmem:[%s518] sm:$0xff]
    %v520 = vld [vmem:[%s518 + $0x8] sm:$0xff]
    %v521 = vld [vmem:[%s518 + $0x10] sm:$0xff]
    %v522 = vld [vmem:[%s518 + $0x18] sm:$0xff]
    %s523 = scalar_lea.vmem %s8, 3
    %v524 = vld [vmem:[%s523] sm:$0x1]
    %v526 = vlaneseq
    %v527 = vshrl.u32 %v526, 7
    %v528 = vsub.s32 0, %v527
    %v529 = vrot.slane %v524, %v528
    %v532 = vsel %vm278, %v264, 0
    %534 = vmatprep.subr.mxu0 0.0
    %535 = vmatpush1.msra.mxu0 %v519
    %536 = vmatprep.subr.mxu0 0.0
    %537 = vmatpush1.msra.mxu0 %v520
    %538 = vmatprep.subr.mxu0 0.0
    %539 = vmatpush1.msra.mxu0 %v521
    %540 = vmatprep.subr.mxu0 0.0
    %541 = vmatpush1.msra.mxu0 %v522
    %542 = vmatprep.subr.mxu0 0.0
    %543 = vmatpush1.msra.mxu0 0.0
    %544 = vmatprep.subr.mxu0 0.0
    %545 = vmatpush1.msra.mxu0 0.0
    %546 = vmatprep.subr.mxu0 0.0
    %547 = vmatpush1.msra.mxu0 0.0
    %548 = vmatprep.subr.mxu0 0.0
    %549 = vmatpush1.msra.mxu0 0.0
    %550 = vmatprep.subr.mxu0 0.0
    %551 = vmatpush1.msra.mxu0 0.0
    %552 = vmatprep.subr.mxu0 0.0
    %553 = vmatpush1.msra.mxu0 0.0
    %554 = vmatprep.subr.mxu0 0.0
    %555 = vmatpush1.msra.mxu0 0.0
    %556 = vmatprep.subr.mxu0 0.0
    %557 = vmatpush1.msra.mxu0 0.0
    %558 = vmatprep.subr.mxu0 0.0
    %559 = vmatpush1.msra.mxu0 0.0
    %560 = vmatprep.subr.mxu0 0.0
    %561 = vmatpush1.msra.mxu0 0.0
    %562 = vmatprep.subr.mxu0 0.0
    %563 = vmatpush1.msra.mxu0 0.0
    %564 = vmatprep.subr.mxu0 0.0
    %565 = vmatpush1.msra.mxu0 0.0
    %566 = vmatprep.subr.mxu0 0.0
    %567 = vmatpush1.msra.mxu0 0.0
    %568 = vmatprep.subr.mxu0 0.0
    %569 = vmatpush1.msra.mxu0 0.0
    %570 = vmatprep.subr.mxu0 0.0
    %571 = vmatpush1.msra.mxu0 0.0
    %572 = vmatprep.subr.mxu0 0.0
    %573 = vmatpush1.msra.mxu0 0.0
    %574 = vmatprep.subr.mxu0 0.0
    %575 = vmatpush1.msra.mxu0 0.0
    %576 = vmatprep.subr.mxu0 0.0
    %577 = vmatpush1.msra.mxu0 0.0
    %578 = vmatprep.subr.mxu0 0.0
    %579 = vmatpush1.msra.mxu0 0.0
    %580 = vmatprep.subr.mxu0 0.0
    %581 = vmatpush1.msra.mxu0 0.0
    %582 = vmatprep.subr.mxu0 0.0
    %583 = vmatpush1.msra.mxu0 0.0
    %584 = vmatprep.subr.mxu0 0.0
    %585 = vmatpush1.msra.mxu0 0.0
    %586 = vmatprep.subr.mxu0 0.0
    %587 = vmatpush1.msra.mxu0 0.0
    %588 = vmatprep.subr.mxu0 0.0
    %589 = vmatpush1.msra.mxu0 0.0
    %590 = vmatprep.subr.mxu0 0.0
    %591 = vmatpush1.msra.mxu0 0.0
    %592 = vmatprep.subr.mxu0 0.0
    %593 = vmatpush1.msra.mxu0 0.0
    %594 = vmatprep.subr.mxu0 0.0
    %595 = vmatpush1.msra.mxu0 0.0
    %596 = vmatprep.subr.mxu0 0.0
    %597 = vmatpush1.msra.mxu0 0.0
    %598 = vmatprep.mubr.f32.mxu0 0.0
    %599 = vmatmul.mubr.f32.gmra.mrb[0].mxu0 %v532
    %v600 = vpop.f32.mrb[0].mxu0
    %v601 = vadd.f32 %v529, %v600
    %v602 = vpop.f32.mrb[0].mxu0
    %603 = vdwg.mxu0
    %s604 = scalar_lea.vmem [#allocation7], 128
    %v605 = vld [vmem:[%s604] sm:$0xff]
    %v606 = vld [vmem:[%s604 + $0x8] sm:$0xff]
    %v607 = vld [vmem:[%s604 + $0x10] sm:$0xff]
    %v608 = vld [vmem:[%s604 + $0x18] sm:$0xff]
    %s609 = scalar_lea.vmem %s8, 4
    %v610 = vld [vmem:[%s609] sm:$0x1]
    %v612 = vlaneseq
    %v613 = vshrl.u32 %v612, 7
    %v614 = vsub.s32 0, %v613
    %v615 = vrot.slane %v610, %v614
    %617 = vmatprep.subr.mxu0 0.0
    %618 = vmatpush1.msra.mxu0 %v605
    %619 = vmatprep.subr.mxu0 0.0
    %620 = vmatpush1.msra.mxu0 %v606
    %621 = vmatprep.subr.mxu0 0.0
    %622 = vmatpush1.msra.mxu0 %v607
    %623 = vmatprep.subr.mxu0 0.0
    %624 = vmatpush1.msra.mxu0 %v608
    %625 = vmatprep.subr.mxu0 0.0
    %626 = vmatpush1.msra.mxu0 0.0
    %627 = vmatprep.subr.mxu0 0.0
    %628 = vmatpush1.msra.mxu0 0.0
    %629 = vmatprep.subr.mxu0 0.0
    %630 = vmatpush1.msra.mxu0 0.0
    %631 = vmatprep.subr.mxu0 0.0
    %632 = vmatpush1.msra.mxu0 0.0
    %633 = vmatprep.subr.mxu0 0.0
    %634 = vmatpush1.msra.mxu0 0.0
    %635 = vmatprep.subr.mxu0 0.0
    %636 = vmatpush1.msra.mxu0 0.0
    %637 = vmatprep.subr.mxu0 0.0
    %638 = vmatpush1.msra.mxu0 0.0
    %639 = vmatprep.subr.mxu0 0.0
    %640 = vmatpush1.msra.mxu0 0.0
    %641 = vmatprep.subr.mxu0 0.0
    %642 = vmatpush1.msra.mxu0 0.0
    %643 = vmatprep.subr.mxu0 0.0
    %644 = vmatpush1.msra.mxu0 0.0
    %645 = vmatprep.subr.mxu0 0.0
    %646 = vmatpush1.msra.mxu0 0.0
    %647 = vmatprep.subr.mxu0 0.0
    %648 = vmatpush1.msra.mxu0 0.0
    %649 = vmatprep.subr.mxu0 0.0
    %650 = vmatpush1.msra.mxu0 0.0
    %651 = vmatprep.subr.mxu0 0.0
    %652 = vmatpush1.msra.mxu0 0.0
    %653 = vmatprep.subr.mxu0 0.0
    %654 = vmatpush1.msra.mxu0 0.0
    %655 = vmatprep.subr.mxu0 0.0
    %656 = vmatpush1.msra.mxu0 0.0
    %657 = vmatprep.subr.mxu0 0.0
    %658 = vmatpush1.msra.mxu0 0.0
    %659 = vmatprep.subr.mxu0 0.0
    %660 = vmatpush1.msra.mxu0 0.0
    %661 = vmatprep.subr.mxu0 0.0
    %662 = vmatpush1.msra.mxu0 0.0
    %663 = vmatprep.subr.mxu0 0.0
    %664 = vmatpush1.msra.mxu0 0.0
    %665 = vmatprep.subr.mxu0 0.0
    %666 = vmatpush1.msra.mxu0 0.0
    %667 = vmatprep.subr.mxu0 0.0
    %668 = vmatpush1.msra.mxu0 0.0
    %669 = vmatprep.subr.mxu0 0.0
    %670 = vmatpush1.msra.mxu0 0.0
    %671 = vmatprep.subr.mxu0 0.0
    %672 = vmatpush1.msra.mxu0 0.0
    %673 = vmatprep.subr.mxu0 0.0
    %674 = vmatpush1.msra.mxu0 0.0
    %675 = vmatprep.subr.mxu0 0.0
    %676 = vmatpush1.msra.mxu0 0.0
    %677 = vmatprep.subr.mxu0 0.0
    %678 = vmatpush1.msra.mxu0 0.0
    %679 = vmatprep.subr.mxu0 0.0
    %680 = vmatpush1.msra.mxu0 0.0
    %681 = vmatprep.mubr.f32.mxu0 0.0
    %682 = vmatmul.mubr.f32.gmra.mrb[0].mxu0 %v532
    %v683 = vpop.f32.mrb[0].mxu0
    %v684 = vadd.f32 %v615, %v683
    %v685 = vpop.f32.mrb[0].mxu0
    %686 = vdwg.mxu0
    %s687 = scalar_lea.vmem [#allocation7], 160
    %v688 = vld [vmem:[%s687] sm:$0xff]
    %v689 = vld [vmem:[%s687 + $0x8] sm:$0xff]
    %v690 = vld [vmem:[%s687 + $0x10] sm:$0xff]
    %v691 = vld [vmem:[%s687 + $0x18] sm:$0xff]
    %s692 = scalar_lea.vmem %s8, 5
    %v693 = vld [vmem:[%s692] sm:$0x1]
    %v695 = vlaneseq
    %v696 = vshrl.u32 %v695, 7
    %v697 = vsub.s32 0, %v696
    %v698 = vrot.slane %v693, %v697
    %700 = vmatprep.subr.mxu0 0.0
    %701 = vmatpush1.msra.mxu0 %v688
    %702 = vmatprep.subr.mxu0 0.0
    %703 = vmatpush1.msra.mxu0 %v689
    %704 = vmatprep.subr.mxu0 0.0
    %705 = vmatpush1.msra.mxu0 %v690
    %706 = vmatprep.subr.mxu0 0.0
    %707 = vmatpush1.msra.mxu0 %v691
    %708 = vmatprep.subr.mxu0 0.0
    %709 = vmatpush1.msra.mxu0 0.0
    %710 = vmatprep.subr.mxu0 0.0
    %711 = vmatpush1.msra.mxu0 0.0
    %712 = vmatprep.subr.mxu0 0.0
    %713 = vmatpush1.msra.mxu0 0.0
    %714 = vmatprep.subr.mxu0 0.0
    %715 = vmatpush1.msra.mxu0 0.0
    %716 = vmatprep.subr.mxu0 0.0
    %717 = vmatpush1.msra.mxu0 0.0
    %718 = vmatprep.subr.mxu0 0.0
    %719 = vmatpush1.msra.mxu0 0.0
    %720 = vmatprep.subr.mxu0 0.0
    %721 = vmatpush1.msra.mxu0 0.0
    %722 = vmatprep.subr.mxu0 0.0
    %723 = vmatpush1.msra.mxu0 0.0
    %724 = vmatprep.subr.mxu0 0.0
    %725 = vmatpush1.msra.mxu0 0.0
    %726 = vmatprep.subr.mxu0 0.0
    %727 = vmatpush1.msra.mxu0 0.0
    %728 = vmatprep.subr.mxu0 0.0
    %729 = vmatpush1.msra.mxu0 0.0
    %730 = vmatprep.subr.mxu0 0.0
    %731 = vmatpush1.msra.mxu0 0.0
    %732 = vmatprep.subr.mxu0 0.0
    %733 = vmatpush1.msra.mxu0 0.0
    %734 = vmatprep.subr.mxu0 0.0
    %735 = vmatpush1.msra.mxu0 0.0
    %736 = vmatprep.subr.mxu0 0.0
    %737 = vmatpush1.msra.mxu0 0.0
    %738 = vmatprep.subr.mxu0 0.0
    %739 = vmatpush1.msra.mxu0 0.0
    %740 = vmatprep.subr.mxu0 0.0
    %741 = vmatpush1.msra.mxu0 0.0
    %742 = vmatprep.subr.mxu0 0.0
    %743 = vmatpush1.msra.mxu0 0.0
    %744 = vmatprep.subr.mxu0 0.0
    %745 = vmatpush1.msra.mxu0 0.0
    %746 = vmatprep.subr.mxu0 0.0
    %747 = vmatpush1.msra.mxu0 0.0
    %748 = vmatprep.subr.mxu0 0.0
    %749 = vmatpush1.msra.mxu0 0.0
    %750 = vmatprep.subr.mxu0 0.0
    %751 = vmatpush1.msra.mxu0 0.0
    %752 = vmatprep.subr.mxu0 0.0
    %753 = vmatpush1.msra.mxu0 0.0
    %754 = vmatprep.subr.mxu0 0.0
    %755 = vmatpush1.msra.mxu0 0.0
    %756 = vmatprep.subr.mxu0 0.0
    %757 = vmatpush1.msra.mxu0 0.0
    %758 = vmatprep.subr.mxu0 0.0
    %759 = vmatpush1.msra.mxu0 0.0
    %760 = vmatprep.subr.mxu0 0.0
    %761 = vmatpush1.msra.mxu0 0.0
    %762 = vmatprep.subr.mxu0 0.0
    %763 = vmatpush1.msra.mxu0 0.0
    %764 = vmatprep.mubr.f32.mxu0 0.0
    %765 = vmatmul.mubr.f32.gmra.mrb[0].mxu0 %v532
    %v766 = vpop.f32.mrb[0].mxu0
    %v767 = vadd.f32 %v698, %v766
    %v768 = vpop.f32.mrb[0].mxu0
    %769 = vdwg.mxu0
    %s770 = scalar_lea.vmem [#allocation7], 192
    %v771 = vld [vmem:[%s770] sm:$0xff]
    %v772 = vld [vmem:[%s770 + $0x8] sm:$0xff]
    %v773 = vld [vmem:[%s770 + $0x10] sm:$0xff]
    %v774 = vld [vmem:[%s770 + $0x18] sm:$0xff]
    %s775 = scalar_lea.vmem %s8, 6
    %v776 = vld [vmem:[%s775] sm:$0x1]
    %v778 = vlaneseq
    %v779 = vshrl.u32 %v778, 7
    %v780 = vsub.s32 0, %v779
    %v781 = vrot.slane %v776, %v780
    %v784 = vsel %vm278, %v266, 0
    %786 = vmatprep.subr.mxu0 0.0
    %787 = vmatpush1.msra.mxu0 %v771
    %788 = vmatprep.subr.mxu0 0.0
    %789 = vmatpush1.msra.mxu0 %v772
    %790 = vmatprep.subr.mxu0 0.0
    %791 = vmatpush1.msra.mxu0 %v773
    %792 = vmatprep.subr.mxu0 0.0
    %793 = vmatpush1.msra.mxu0 %v774
    %794 = vmatprep.subr.mxu0 0.0
    %795 = vmatpush1.msra.mxu0 0.0
    %796 = vmatprep.subr.mxu0 0.0
    %797 = vmatpush1.msra.mxu0 0.0
    %798 = vmatprep.subr.mxu0 0.0
    %799 = vmatpush1.msra.mxu0 0.0
    %800 = vmatprep.subr.mxu0 0.0
    %801 = vmatpush1.msra.mxu0 0.0
    %802 = vmatprep.subr.mxu0 0.0
    %803 = vmatpush1.msra.mxu0 0.0
    %804 = vmatprep.subr.mxu0 0.0
    %805 = vmatpush1.msra.mxu0 0.0
    %806 = vmatprep.subr.mxu0 0.0
    %807 = vmatpush1.msra.mxu0 0.0
    %808 = vmatprep.subr.mxu0 0.0
    %809 = vmatpush1.msra.mxu0 0.0
    %810 = vmatprep.subr.mxu0 0.0
    %811 = vmatpush1.msra.mxu0 0.0
    %812 = vmatprep.subr.mxu0 0.0
    %813 = vmatpush1.msra.mxu0 0.0
    %814 = vmatprep.subr.mxu0 0.0
    %815 = vmatpush1.msra.mxu0 0.0
    %816 = vmatprep.subr.mxu0 0.0
    %817 = vmatpush1.msra.mxu0 0.0
    %818 = vmatprep.subr.mxu0 0.0
    %819 = vmatpush1.msra.mxu0 0.0
    %820 = vmatprep.subr.mxu0 0.0
    %821 = vmatpush1.msra.mxu0 0.0
    %822 = vmatprep.subr.mxu0 0.0
    %823 = vmatpush1.msra.mxu0 0.0
    %824 = vmatprep.subr.mxu0 0.0
    %825 = vmatpush1.msra.mxu0 0.0
    %826 = vmatprep.subr.mxu0 0.0
    %827 = vmatpush1.msra.mxu0 0.0
    %828 = vmatprep.subr.mxu0 0.0
    %829 = vmatpush1.msra.mxu0 0.0
    %830 = vmatprep.subr.mxu0 0.0
    %831 = vmatpush1.msra.mxu0 0.0
    %832 = vmatprep.subr.mxu0 0.0
    %833 = vmatpush1.msra.mxu0 0.0
    %834 = vmatprep.subr.mxu0 0.0
    %835 = vmatpush1.msra.mxu0 0.0
    %836 = vmatprep.subr.mxu0 0.0
    %837 = vmatpush1.msra.mxu0 0.0
    %838 = vmatprep.subr.mxu0 0.0
    %839 = vmatpush1.msra.mxu0 0.0
    %840 = vmatprep.subr.mxu0 0.0
    %841 = vmatpush1.msra.mxu0 0.0
    %842 = vmatprep.subr.mxu0 0.0
    %843 = vmatpush1.msra.mxu0 0.0
    %844 = vmatprep.subr.mxu0 0.0
    %845 = vmatpush1.msra.mxu0 0.0
    %846 = vmatprep.subr.mxu0 0.0
    %847 = vmatpush1.msra.mxu0 0.0
    %848 = vmatprep.subr.mxu0 0.0
    %849 = vmatpush1.msra.mxu0 0.0
    %850 = vmatprep.mubr.f32.mxu0 0.0
    %851 = vmatmul.mubr.f32.gmra.mrb[0].mxu0 %v784
    %v852 = vpop.f32.mrb[0].mxu0
    %v853 = vadd.f32 %v781, %v852
    %v854 = vpop.f32.mrb[0].mxu0
    %855 = vdwg.mxu0
    %s856 = scalar_lea.vmem [#allocation7], 224
    %v857 = vld [vmem:[%s856] sm:$0xff]
    %v858 = vld [vmem:[%s856 + $0x8] sm:$0xff]
    %v859 = vld [vmem:[%s856 + $0x10] sm:$0xff]
    %v860 = vld [vmem:[%s856 + $0x18] sm:$0xff]
    %s861 = scalar_lea.vmem %s8, 7
    %v862 = vld [vmem:[%s861] sm:$0x1]
    %v864 = vlaneseq
    %v865 = vshrl.u32 %v864, 7
    %v866 = vsub.s32 0, %v865
    %v867 = vrot.slane %v862, %v866
    %869 = vmatprep.subr.mxu0 0.0
    %870 = vmatpush1.msra.mxu0 %v857
    %871 = vmatprep.subr.mxu0 0.0
    %872 = vmatpush1.msra.mxu0 %v858
    %873 = vmatprep.subr.mxu0 0.0
    %874 = vmatpush1.msra.mxu0 %v859
    %875 = vmatprep.subr.mxu0 0.0
    %876 = vmatpush1.msra.mxu0 %v860
    %877 = vmatprep.subr.mxu0 0.0
    %878 = vmatpush1.msra.mxu0 0.0
    %879 = vmatprep.subr.mxu0 0.0
    %880 = vmatpush1.msra.mxu0 0.0
    %881 = vmatprep.subr.mxu0 0.0
    %882 = vmatpush1.msra.mxu0 0.0
    %883 = vmatprep.subr.mxu0 0.0
    %884 = vmatpush1.msra.mxu0 0.0
    %885 = vmatprep.subr.mxu0 0.0
    %886 = vmatpush1.msra.mxu0 0.0
    %887 = vmatprep.subr.mxu0 0.0
    %888 = vmatpush1.msra.mxu0 0.0
    %889 = vmatprep.subr.mxu0 0.0
    %890 = vmatpush1.msra.mxu0 0.0
    %891 = vmatprep.subr.mxu0 0.0
    %892 = vmatpush1.msra.mxu0 0.0
    %893 = vmatprep.subr.mxu0 0.0
    %894 = vmatpush1.msra.mxu0 0.0
    %895 = vmatprep.subr.mxu0 0.0
    %896 = vmatpush1.msra.mxu0 0.0
    %897 = vmatprep.subr.mxu0 0.0
    %898 = vmatpush1.msra.mxu0 0.0
    %899 = vmatprep.subr.mxu0 0.0
    %900 = vmatpush1.msra.mxu0 0.0
    %901 = vmatprep.subr.mxu0 0.0
    %902 = vmatpush1.msra.mxu0 0.0
    %903 = vmatprep.subr.mxu0 0.0
    %904 = vmatpush1.msra.mxu0 0.0
    %905 = vmatprep.subr.mxu0 0.0
    %906 = vmatpush1.msra.mxu0 0.0
    %907 = vmatprep.subr.mxu0 0.0
    %908 = vmatpush1.msra.mxu0 0.0
    %909 = vmatprep.subr.mxu0 0.0
    %910 = vmatpush1.msra.mxu0 0.0
    %911 = vmatprep.subr.mxu0 0.0
    %912 = vmatpush1.msra.mxu0 0.0
    %913 = vmatprep.subr.mxu0 0.0
    %914 = vmatpush1.msra.mxu0 0.0
    %915 = vmatprep.subr.mxu0 0.0
    %916 = vmatpush1.msra.mxu0 0.0
    %917 = vmatprep.subr.mxu0 0.0
    %918 = vmatpush1.msra.mxu0 0.0
    %919 = vmatprep.subr.mxu0 0.0
    %920 = vmatpush1.msra.mxu0 0.0
    %921 = vmatprep.subr.mxu0 0.0
    %922 = vmatpush1.msra.mxu0 0.0
    %923 = vmatprep.subr.mxu0 0.0
    %924 = vmatpush1.msra.mxu0 0.0
    %925 = vmatprep.subr.mxu0 0.0
    %926 = vmatpush1.msra.mxu0 0.0
    %927 = vmatprep.subr.mxu0 0.0
    %928 = vmatpush1.msra.mxu0 0.0
    %929 = vmatprep.subr.mxu0 0.0
    %930 = vmatpush1.msra.mxu0 0.0
    %931 = vmatprep.subr.mxu0 0.0
    %932 = vmatpush1.msra.mxu0 0.0
    %933 = vmatprep.mubr.f32.mxu0 0.0
    %934 = vmatmul.mubr.f32.gmra.mrb[0].mxu0 %v784
    %v935 = vpop.f32.mrb[0].mxu0
    %v936 = vadd.f32 %v867, %v935
    %v937 = vpop.f32.mrb[0].mxu0
    %938 = vdwg.mxu0
    %s939 = scalar_lea.vmem [#allocation7], 256
    %v940 = vld [vmem:[%s939] sm:$0xff]
    %v941 = vld [vmem:[%s939 + $0x8] sm:$0xff]
    %v942 = vld [vmem:[%s939 + $0x10] sm:$0xff]
    %v943 = vld [vmem:[%s939 + $0x18] sm:$0xff]
    %s944 = scalar_lea.vmem %s8, 8
    %v945 = vld [vmem:[%s944] sm:$0x1]
    %v947 = vlaneseq
    %v948 = vshrl.u32 %v947, 7
    %v949 = vsub.s32 0, %v948
    %v950 = vrot.slane %v945, %v949
    %952 = vmatprep.subr.mxu0 0.0
    %953 = vmatpush1.msra.mxu0 %v940
    %954 = vmatprep.subr.mxu0 0.0
    %955 = vmatpush1.msra.mxu0 %v941
    %956 = vmatprep.subr.mxu0 0.0
    %957 = vmatpush1.msra.mxu0 %v942
    %958 = vmatprep.subr.mxu0 0.0
    %959 = vmatpush1.msra.mxu0 %v943
    %960 = vmatprep.subr.mxu0 0.0
    %961 = vmatpush1.msra.mxu0 0.0
    %962 = vmatprep.subr.mxu0 0.0
    %963 = vmatpush1.msra.mxu0 0.0
    %964 = vmatprep.subr.mxu0 0.0
    %965 = vmatpush1.msra.mxu0 0.0
    %966 = vmatprep.subr.mxu0 0.0
    %967 = vmatpush1.msra.mxu0 0.0
    %968 = vmatprep.subr.mxu0 0.0
    %969 = vmatpush1.msra.mxu0 0.0
    %970 = vmatprep.subr.mxu0 0.0
    %971 = vmatpush1.msra.mxu0 0.0
    %972 = vmatprep.subr.mxu0 0.0
    %973 = vmatpush1.msra.mxu0 0.0
    %974 = vmatprep.subr.mxu0 0.0
    %975 = vmatpush1.msra.mxu0 0.0
    %976 = vmatprep.subr.mxu0 0.0
    %977 = vmatpush1.msra.mxu0 0.0
    %978 = vmatprep.subr.mxu0 0.0
    %979 = vmatpush1.msra.mxu0 0.0
    %980 = vmatprep.subr.mxu0 0.0
    %981 = vmatpush1.msra.mxu0 0.0
    %982 = vmatprep.subr.mxu0 0.0
    %983 = vmatpush1.msra.mxu0 0.0
    %984 = vmatprep.subr.mxu0 0.0
    %985 = vmatpush1.msra.mxu0 0.0
    %986 = vmatprep.subr.mxu0 0.0
    %987 = vmatpush1.msra.mxu0 0.0
    %988 = vmatprep.subr.mxu0 0.0
    %989 = vmatpush1.msra.mxu0 0.0
    %990 = vmatprep.subr.mxu0 0.0
    %991 = vmatpush1.msra.mxu0 0.0
    %992 = vmatprep.subr.mxu0 0.0
    %993 = vmatpush1.msra.mxu0 0.0
    %994 = vmatprep.subr.mxu0 0.0
    %995 = vmatpush1.msra.mxu0 0.0
    %996 = vmatprep.subr.mxu0 0.0
    %997 = vmatpush1.msra.mxu0 0.0
    %998 = vmatprep.subr.mxu0 0.0
    %999 = vmatpush1.msra.mxu0 0.0
    %1000 = vmatprep.subr.mxu0 0.0
    %1001 = vmatpush1.msra.mxu0 0.0
    %1002 = vmatprep.subr.mxu0 0.0
    %1003 = vmatpush1.msra.mxu0 0.0
    %1004 = vmatprep.subr.mxu0 0.0
    %1005 = vmatpush1.msra.mxu0 0.0
    %1006 = vmatprep.subr.mxu0 0.0
    %1007 = vmatpush1.msra.mxu0 0.0
    %1008 = vmatprep.subr.mxu0 0.0
    %1009 = vmatpush1.msra.mxu0 0.0
    %1010 = vmatprep.subr.mxu0 0.0
    %1011 = vmatpush1.msra.mxu0 0.0
    %1012 = vmatprep.subr.mxu0 0.0
    %1013 = vmatpush1.msra.mxu0 0.0
    %1014 = vmatprep.subr.mxu0 0.0
    %1015 = vmatpush1.msra.mxu0 0.0
    %1016 = vmatprep.mubr.f32.mxu0 0.0
    %1017 = vmatmul.mubr.f32.gmra.mrb[0].mxu0 %v784
    %v1018 = vpop.f32.mrb[0].mxu0
    %v1019 = vadd.f32 %v950, %v1018
    %v1020 = vpop.f32.mrb[0].mxu0
    %1021 = vdwg.mxu0
    %v1022 = vld [vmem:[#allocation5] sm:$0xff]
    %v1023 = vld [vmem:[#allocation5 + $0x8] sm:$0xff]
    %v1024 = vld [vmem:[#allocation5 + $0x10] sm:$0xff]
    %v1025 = vld [vmem:[#allocation5 + $0x18] sm:$0xff]
    %v1026 = vld [vmem:[%s7] sm:$0x1]
    %v1028 = vlaneseq
    %v1029 = vshrl.u32 %v1028, 7
    %v1030 = vsub.s32 0, %v1029
    %v1031 = vrot.slane %v1026, %v1030
    %v1034 = vsel %vm278, %v261, 0
    %1036 = vmatprep.subr.mxu0 0.0
    %1037 = vmatpush1.msra.mxu0 %v1022
    %1038 = vmatprep.subr.mxu0 0.0
    %1039 = vmatpush1.msra.mxu0 %v1023
    %1040 = vmatprep.subr.mxu0 0.0
    %1041 = vmatpush1.msra.mxu0 %v1024
    %1042 = vmatprep.subr.mxu0 0.0
    %1043 = vmatpush1.msra.mxu0 %v1025
    %1044 = vmatprep.subr.mxu0 0.0
    %1045 = vmatpush1.msra.mxu0 0.0
    %1046 = vmatprep.subr.mxu0 0.0
    %1047 = vmatpush1.msra.mxu0 0.0
    %1048 = vmatprep.subr.mxu0 0.0
    %1049 = vmatpush1.msra.mxu0 0.0
    %1050 = vmatprep.subr.mxu0 0.0
    %1051 = vmatpush1.msra.mxu0 0.0
    %1052 = vmatprep.subr.mxu0 0.0
    %1053 = vmatpush1.msra.mxu0 0.0
    %1054 = vmatprep.subr.mxu0 0.0
    %1055 = vmatpush1.msra.mxu0 0.0
    %1056 = vmatprep.subr.mxu0 0.0
    %1057 = vmatpush1.msra.mxu0 0.0
    %1058 = vmatprep.subr.mxu0 0.0
    %1059 = vmatpush1.msra.mxu0 0.0
    %1060 = vmatprep.subr.mxu0 0.0
    %1061 = vmatpush1.msra.mxu0 0.0
    %1062 = vmatprep.subr.mxu0 0.0
    %1063 = vmatpush1.msra.mxu0 0.0
    %1064 = vmatprep.subr.mxu0 0.0
    %1065 = vmatpush1.msra.mxu0 0.0
    %1066 = vmatprep.subr.mxu0 0.0
    %1067 = vmatpush1.msra.mxu0 0.0
    %1068 = vmatprep.subr.mxu0 0.0
    %1069 = vmatpush1.msra.mxu0 0.0
    %1070 = vmatprep.subr.mxu0 0.0
    %1071 = vmatpush1.msra.mxu0 0.0
    %1072 = vmatprep.subr.mxu0 0.0
    %1073 = vmatpush1.msra.mxu0 0.0
    %1074 = vmatprep.subr.mxu0 0.0
    %1075 = vmatpush1.msra.mxu0 0.0
    %1076 = vmatprep.subr.mxu0 0.0
    %1077 = vmatpush1.msra.mxu0 0.0
    %1078 = vmatprep.subr.mxu0 0.0
    %1079 = vmatpush1.msra.mxu0 0.0
    %1080 = vmatprep.subr.mxu0 0.0
    %1081 = vmatpush1.msra.mxu0 0.0
    %1082 = vmatprep.subr.mxu0 0.0
    %1083 = vmatpush1.msra.mxu0 0.0
    %1084 = vmatprep.subr.mxu0 0.0
    %1085 = vmatpush1.msra.mxu0 0.0
    %1086 = vmatprep.subr.mxu0 0.0
    %1087 = vmatpush1.msra.mxu0 0.0
    %1088 = vmatprep.subr.mxu0 0.0
    %1089 = vmatpush1.msra.mxu0 0.0
    %1090 = vmatprep.subr.mxu0 0.0
    %1091 = vmatpush1.msra.mxu0 0.0
    %1092 = vmatprep.subr.mxu0 0.0
    %1093 = vmatpush1.msra.mxu0 0.0
    %1094 = vmatprep.subr.mxu0 0.0
    %1095 = vmatpush1.msra.mxu0 0.0
    %1096 = vmatprep.subr.mxu0 0.0
    %1097 = vmatpush1.msra.mxu0 0.0
    %1098 = vmatprep.subr.mxu0 0.0
    %1099 = vmatpush1.msra.mxu0 0.0
    %1100 = vmatprep.mubr.f32.mxu0 0.0
    %1101 = vmatmul.mubr.f32.gmra.mrb[0].mxu0 %v1034
    %v1102 = vpop.f32.mrb[0].mxu0
    %v1103 = vadd.f32 %v1031, %v1102
    %v1104 = vpop.f32.mrb[0].mxu0
    %1105 = vdwg.mxu0
    %s1106 = scalar_lea.vmem [#allocation5], 32
    %v1107 = vld [vmem:[%s1106] sm:$0xff]
    %v1108 = vld [vmem:[%s1106 + $0x8] sm:$0xff]
    %v1109 = vld [vmem:[%s1106 + $0x10] sm:$0xff]
    %v1110 = vld [vmem:[%s1106 + $0x18] sm:$0xff]
    %s1111 = scalar_lea.vmem %s7, 1
    %v1112 = vld [vmem:[%s1111] sm:$0x1]
    %v1114 = vlaneseq
    %v1115 = vshrl.u32 %v1114, 7
    %v1116 = vsub.s32 0, %v1115
    %v1117 = vrot.slane %v1112, %v1116
    %1119 = vmatprep.subr.mxu0 0.0
    %1120 = vmatpush1.msra.mxu0 %v1107
    %1121 = vmatprep.subr.mxu0 0.0
    %1122 = vmatpush1.msra.mxu0 %v1108
    %1123 = vmatprep.subr.mxu0 0.0
    %1124 = vmatpush1.msra.mxu0 %v1109
    %1125 = vmatprep.subr.mxu0 0.0
    %1126 = vmatpush1.msra.mxu0 %v1110
    %1127 = vmatprep.subr.mxu0 0.0
    %1128 = vmatpush1.msra.mxu0 0.0
    %1129 = vmatprep.subr.mxu0 0.0
    %1130 = vmatpush1.msra.mxu0 0.0
    %1131 = vmatprep.subr.mxu0 0.0
    %1132 = vmatpush1.msra.mxu0 0.0
    %1133 = vmatprep.subr.mxu0 0.0
    %1134 = vmatpush1.msra.mxu0 0.0
    %1135 = vmatprep.subr.mxu0 0.0
    %1136 = vmatpush1.msra.mxu0 0.0
    %1137 = vmatprep.subr.mxu0 0.0
    %1138 = vmatpush1.msra.mxu0 0.0
    %1139 = vmatprep.subr.mxu0 0.0
    %1140 = vmatpush1.msra.mxu0 0.0
    %1141 = vmatprep.subr.mxu0 0.0
    %1142 = vmatpush1.msra.mxu0 0.0
    %1143 = vmatprep.subr.mxu0 0.0
    %1144 = vmatpush1.msra.mxu0 0.0
    %1145 = vmatprep.subr.mxu0 0.0
    %1146 = vmatpush1.msra.mxu0 0.0
    %1147 = vmatprep.subr.mxu0 0.0
    %1148 = vmatpush1.msra.mxu0 0.0
    %1149 = vmatprep.subr.mxu0 0.0
    %1150 = vmatpush1.msra.mxu0 0.0
    %1151 = vmatprep.subr.mxu0 0.0
    %1152 = vmatpush1.msra.mxu0 0.0
    %1153 = vmatprep.subr.mxu0 0.0
    %1154 = vmatpush1.msra.mxu0 0.0
    %1155 = vmatprep.subr.mxu0 0.0
    %1156 = vmatpush1.msra.mxu0 0.0
    %1157 = vmatprep.subr.mxu0 0.0
    %1158 = vmatpush1.msra.mxu0 0.0
    %1159 = vmatprep.subr.mxu0 0.0
    %1160 = vmatpush1.msra.mxu0 0.0
    %1161 = vmatprep.subr.mxu0 0.0
    %1162 = vmatpush1.msra.mxu0 0.0
    %1163 = vmatprep.subr.mxu0 0.0
    %1164 = vmatpush1.msra.mxu0 0.0
    %1165 = vmatprep.subr.mxu0 0.0
    %1166 = vmatpush1.msra.mxu0 0.0
    %1167 = vmatprep.subr.mxu0 0.0
    %1168 = vmatpush1.msra.mxu0 0.0
    %1169 = vmatprep.subr.mxu0 0.0
    %1170 = vmatpush1.msra.mxu0 0.0
    %1171 = vmatprep.subr.mxu0 0.0
    %1172 = vmatpush1.msra.mxu0 0.0
    %1173 = vmatprep.subr.mxu0 0.0
    %1174 = vmatpush1.msra.mxu0 0.0
    %1175 = vmatprep.subr.mxu0 0.0
    %1176 = vmatpush1.msra.mxu0 0.0
    %1177 = vmatprep.subr.mxu0 0.0
    %1178 = vmatpush1.msra.mxu0 0.0
    %1179 = vmatprep.subr.mxu0 0.0
    %1180 = vmatpush1.msra.mxu0 0.0
    %1181 = vmatprep.subr.mxu0 0.0
    %1182 = vmatpush1.msra.mxu0 0.0
    %1183 = vmatprep.mubr.f32.mxu0 0.0
    %1184 = vmatmul.mubr.f32.gmra.mrb[0].mxu0 %v1034
    %v1185 = vpop.f32.mrb[0].mxu0
    %v1186 = vadd.f32 %v1117, %v1185
    %v1187 = vpop.f32.mrb[0].mxu0
    %1188 = vdwg.mxu0
    %s1189 = scalar_lea.vmem [#allocation5], 64
    %v1190 = vld [vmem:[%s1189] sm:$0xff]
    %v1191 = vld [vmem:[%s1189 + $0x8] sm:$0xff]
    %v1192 = vld [vmem:[%s1189 + $0x10] sm:$0xff]
    %v1193 = vld [vmem:[%s1189 + $0x18] sm:$0xff]
    %s1194 = scalar_lea.vmem %s7, 2
    %v1195 = vld [vmem:[%s1194] sm:$0x1]
    %v1197 = vlaneseq
    %v1198 = vshrl.u32 %v1197, 7
    %v1199 = vsub.s32 0, %v1198
    %v1200 = vrot.slane %v1195, %v1199
    %1202 = vmatprep.subr.mxu0 0.0
    %1203 = vmatpush1.msra.mxu0 %v1190
    %1204 = vmatprep.subr.mxu0 0.0
    %1205 = vmatpush1.msra.mxu0 %v1191
    %1206 = vmatprep.subr.mxu0 0.0
    %1207 = vmatpush1.msra.mxu0 %v1192
    %1208 = vmatprep.subr.mxu0 0.0
    %1209 = vmatpush1.msra.mxu0 %v1193
    %1210 = vmatprep.subr.mxu0 0.0
    %1211 = vmatpush1.msra.mxu0 0.0
    %1212 = vmatprep.subr.mxu0 0.0
    %1213 = vmatpush1.msra.mxu0 0.0
    %1214 = vmatprep.subr.mxu0 0.0
    %1215 = vmatpush1.msra.mxu0 0.0
    %1216 = vmatprep.subr.mxu0 0.0
    %1217 = vmatpush1.msra.mxu0 0.0
    %1218 = vmatprep.subr.mxu0 0.0
    %1219 = vmatpush1.msra.mxu0 0.0
    %1220 = vmatprep.subr.mxu0 0.0
    %1221 = vmatpush1.msra.mxu0 0.0
    %1222 = vmatprep.subr.mxu0 0.0
    %1223 = vmatpush1.msra.mxu0 0.0
    %1224 = vmatprep.subr.mxu0 0.0
    %1225 = vmatpush1.msra.mxu0 0.0
    %1226 = vmatprep.subr.mxu0 0.0
    %1227 = vmatpush1.msra.mxu0 0.0
    %1228 = vmatprep.subr.mxu0 0.0
    %1229 = vmatpush1.msra.mxu0 0.0
    %1230 = vmatprep.subr.mxu0 0.0
    %1231 = vmatpush1.msra.mxu0 0.0
    %1232 = vmatprep.subr.mxu0 0.0
    %1233 = vmatpush1.msra.mxu0 0.0
    %1234 = vmatprep.subr.mxu0 0.0
    %1235 = vmatpush1.msra.mxu0 0.0
    %1236 = vmatprep.subr.mxu0 0.0
    %1237 = vmatpush1.msra.mxu0 0.0
    %1238 = vmatprep.subr.mxu0 0.0
    %1239 = vmatpush1.msra.mxu0 0.0
    %1240 = vmatprep.subr.mxu0 0.0
    %1241 = vmatpush1.msra.mxu0 0.0
    %1242 = vmatprep.subr.mxu0 0.0
    %1243 = vmatpush1.msra.mxu0 0.0
    %1244 = vmatprep.subr.mxu0 0.0
    %1245 = vmatpush1.msra.mxu0 0.0
    %1246 = vmatprep.subr.mxu0 0.0
    %1247 = vmatpush1.msra.mxu0 0.0
    %1248 = vmatprep.subr.mxu0 0.0
    %1249 = vmatpush1.msra.mxu0 0.0
    %1250 = vmatprep.subr.mxu0 0.0
    %1251 = vmatpush1.msra.mxu0 0.0
    %1252 = vmatprep.subr.mxu0 0.0
    %1253 = vmatpush1.msra.mxu0 0.0
    %1254 = vmatprep.subr.mxu0 0.0
    %1255 = vmatpush1.msra.mxu0 0.0
    %1256 = vmatprep.subr.mxu0 0.0
    %1257 = vmatpush1.msra.mxu0 0.0
    %1258 = vmatprep.subr.mxu0 0.0
    %1259 = vmatpush1.msra.mxu0 0.0
    %1260 = vmatprep.subr.mxu0 0.0
    %1261 = vmatpush1.msra.mxu0 0.0
    %1262 = vmatprep.subr.mxu0 0.0
    %1263 = vmatpush1.msra.mxu0 0.0
    %1264 = vmatprep.subr.mxu0 0.0
    %1265 = vmatpush1.msra.mxu0 0.0
    %1266 = vmatprep.mubr.f32.mxu0 0.0
    %1267 = vmatmul.mubr.f32.gmra.mrb[0].mxu0 %v1034
    %v1268 = vpop.f32.mrb[0].mxu0
    %v1269 = vadd.f32 %v1200, %v1268
    %v1270 = vpop.f32.mrb[0].mxu0
    %1271 = vdwg.mxu0
    %v1272 = vadd.f32 %v1103, %v349
    %v1273 = vxor.u32 %v1272, 2147483648
    %v1274 = vmul.f32 %v1273, 1.442695
    %v1275 = vpow.pop %v1274
    %v1276 = vadd.f32 %v1275, 1.0
    %v1277 = vrcp.pop %v1276
    %v1278 = vmul.f32 1.0, %v1277
    %v1279 = vadd.f32 %v1186, %v432
    %v1280 = vxor.u32 %v1279, 2147483648
    %v1281 = vmul.f32 %v1280, 1.442695
    %v1282 = vpow.pop %v1281
    %v1283 = vadd.f32 %v1282, 1.0
    %v1284 = vrcp.pop %v1283
    %v1285 = vmul.f32 1.0, %v1284
    %v1286 = vmul.f32 %v1278, %v515
    %v1287 = vadd.f32 %v1269, %v1286
    %v1288 = vtanh.pop %v1287
    %v1289 = vsub.f32 1.0, %v1285
    %v1290 = vmul.f32 %v1289, %v1288
    %v1291 = vmul.f32 %v1285, %v262
    %v1292 = vadd.f32 %v1290, %v1291
    %vm1293 = vcmask 254976
    %1294 = vst.msk [vmem:[#allocation9] sm:$0x3] %vm1293, %v1292
    %s1295 = scalar_lea.vmem [#allocation5], 96
    %v1296 = vld [vmem:[%s1295] sm:$0xff]
    %v1297 = vld [vmem:[%s1295 + $0x8] sm:$0xff]
    %v1298 = vld [vmem:[%s1295 + $0x10] sm:$0xff]
    %v1299 = vld [vmem:[%s1295 + $0x18] sm:$0xff]
    %s1300 = scalar_lea.vmem %s7, 3
    %v1301 = vld [vmem:[%s1300] sm:$0x1]
    %v1303 = vlaneseq
    %v1304 = vshrl.u32 %v1303, 7
    %v1305 = vsub.s32 0, %v1304
    %v1306 = vrot.slane %v1301, %v1305
    %v1309 = vsel %vm278, %v1292, 0
    %1311 = vmatprep.subr.mxu0 0.0
    %1312 = vmatpush1.msra.mxu0 %v1296
    %1313 = vmatprep.subr.mxu0 0.0
    %1314 = vmatpush1.msra.mxu0 %v1297
    %1315 = vmatprep.subr.mxu0 0.0
    %1316 = vmatpush1.msra.mxu0 %v1298
    %1317 = vmatprep.subr.mxu0 0.0
    %1318 = vmatpush1.msra.mxu0 %v1299
    %1319 = vmatprep.subr.mxu0 0.0
    %1320 = vmatpush1.msra.mxu0 0.0
    %1321 = vmatprep.subr.mxu0 0.0
    %1322 = vmatpush1.msra.mxu0 0.0
    %1323 = vmatprep.subr.mxu0 0.0
    %1324 = vmatpush1.msra.mxu0 0.0
    %1325 = vmatprep.subr.mxu0 0.0
    %1326 = vmatpush1.msra.mxu0 0.0
    %1327 = vmatprep.subr.mxu0 0.0
    %1328 = vmatpush1.msra.mxu0 0.0
    %1329 = vmatprep.subr.mxu0 0.0
    %1330 = vmatpush1.msra.mxu0 0.0
    %1331 = vmatprep.subr.mxu0 0.0
    %1332 = vmatpush1.msra.mxu0 0.0
    %1333 = vmatprep.subr.mxu0 0.0
    %1334 = vmatpush1.msra.mxu0 0.0
    %1335 = vmatprep.subr.mxu0 0.0
    %1336 = vmatpush1.msra.mxu0 0.0
    %1337 = vmatprep.subr.mxu0 0.0
    %1338 = vmatpush1.msra.mxu0 0.0
    %1339 = vmatprep.subr.mxu0 0.0
    %1340 = vmatpush1.msra.mxu0 0.0
    %1341 = vmatprep.subr.mxu0 0.0
    %1342 = vmatpush1.msra.mxu0 0.0
    %1343 = vmatprep.subr.mxu0 0.0
    %1344 = vmatpush1.msra.mxu0 0.0
    %1345 = vmatprep.subr.mxu0 0.0
    %1346 = vmatpush1.msra.mxu0 0.0
    %1347 = vmatprep.subr.mxu0 0.0
    %1348 = vmatpush1.msra.mxu0 0.0
    %1349 = vmatprep.subr.mxu0 0.0
    %1350 = vmatpush1.msra.mxu0 0.0
    %1351 = vmatprep.subr.mxu0 0.0
    %1352 = vmatpush1.msra.mxu0 0.0
    %1353 = vmatprep.subr.mxu0 0.0
    %1354 = vmatpush1.msra.mxu0 0.0
    %1355 = vmatprep.subr.mxu0 0.0
    %1356 = vmatpush1.msra.mxu0 0.0
    %1357 = vmatprep.subr.mxu0 0.0
    %1358 = vmatpush1.msra.mxu0 0.0
    %1359 = vmatprep.subr.mxu0 0.0
    %1360 = vmatpush1.msra.mxu0 0.0
    %1361 = vmatprep.subr.mxu0 0.0
    %1362 = vmatpush1.msra.mxu0 0.0
    %1363 = vmatprep.subr.mxu0 0.0
    %1364 = vmatpush1.msra.mxu0 0.0
    %1365 = vmatprep.subr.mxu0 0.0
    %1366 = vmatpush1.msra.mxu0 0.0
    %1367 = vmatprep.subr.mxu0 0.0
    %1368 = vmatpush1.msra.mxu0 0.0
    %1369 = vmatprep.subr.mxu0 0.0
    %1370 = vmatpush1.msra.mxu0 0.0
    %1371 = vmatprep.subr.mxu0 0.0
    %1372 = vmatpush1.msra.mxu0 0.0
    %1373 = vmatprep.subr.mxu0 0.0
    %1374 = vmatpush1.msra.mxu0 0.0
    %1375 = vmatprep.mubr.f32.mxu0 0.0
    %1376 = vmatmul.mubr.f32.gmra.mrb[0].mxu0 %v1309
    %v1377 = vpop.f32.mrb[0].mxu0
    %v1378 = vadd.f32 %v1306, %v1377
    %v1379 = vpop.f32.mrb[0].mxu0
    %1380 = vdwg.mxu0
    %s1381 = scalar_lea.vmem [#allocation5], 128
    %v1382 = vld [vmem:[%s1381] sm:$0xff]
    %v1383 = vld [vmem:[%s1381 + $0x8] sm:$0xff]
    %v1384 = vld [vmem:[%s1381 + $0x10] sm:$0xff]
    %v1385 = vld [vmem:[%s1381 + $0x18] sm:$0xff]
    %s1386 = scalar_lea.vmem %s7, 4
    %v1387 = vld [vmem:[%s1386] sm:$0x1]
    %v1389 = vlaneseq
    %v1390 = vshrl.u32 %v1389, 7
    %v1391 = vsub.s32 0, %v1390
    %v1392 = vrot.slane %v1387, %v1391
    %1394 = vmatprep.subr.mxu0 0.0
    %1395 = vmatpush1.msra.mxu0 %v1382
    %1396 = vmatprep.subr.mxu0 0.0
    %1397 = vmatpush1.msra.mxu0 %v1383
    %1398 = vmatprep.subr.mxu0 0.0
    %1399 = vmatpush1.msra.mxu0 %v1384
    %1400 = vmatprep.subr.mxu0 0.0
    %1401 = vmatpush1.msra.mxu0 %v1385
    %1402 = vmatprep.subr.mxu0 0.0
    %1403 = vmatpush1.msra.mxu0 0.0
    %1404 = vmatprep.subr.mxu0 0.0
    %1405 = vmatpush1.msra.mxu0 0.0
    %1406 = vmatprep.subr.mxu0 0.0
    %1407 = vmatpush1.msra.mxu0 0.0
    %1408 = vmatprep.subr.mxu0 0.0
    %1409 = vmatpush1.msra.mxu0 0.0
    %1410 = vmatprep.subr.mxu0 0.0
    %1411 = vmatpush1.msra.mxu0 0.0
    %1412 = vmatprep.subr.mxu0 0.0
    %1413 = vmatpush1.msra.mxu0 0.0
    %1414 = vmatprep.subr.mxu0 0.0
    %1415 = vmatpush1.msra.mxu0 0.0
    %1416 = vmatprep.subr.mxu0 0.0
    %1417 = vmatpush1.msra.mxu0 0.0
    %1418 = vmatprep.subr.mxu0 0.0
    %1419 = vmatpush1.msra.mxu0 0.0
    %1420 = vmatprep.subr.mxu0 0.0
    %1421 = vmatpush1.msra.mxu0 0.0
    %1422 = vmatprep.subr.mxu0 0.0
    %1423 = vmatpush1.msra.mxu0 0.0
    %1424 = vmatprep.subr.mxu0 0.0
    %1425 = vmatpush1.msra.mxu0 0.0
    %1426 = vmatprep.subr.mxu0 0.0
    %1427 = vmatpush1.msra.mxu0 0.0
    %1428 = vmatprep.subr.mxu0 0.0
    %1429 = vmatpush1.msra.mxu0 0.0
    %1430 = vmatprep.subr.mxu0 0.0
    %1431 = vmatpush1.msra.mxu0 0.0
    %1432 = vmatprep.subr.mxu0 0.0
    %1433 = vmatpush1.msra.mxu0 0.0
    %1434 = vmatprep.subr.mxu0 0.0
    %1435 = vmatpush1.msra.mxu0 0.0
    %1436 = vmatprep.subr.mxu0 0.0
    %1437 = vmatpush1.msra.mxu0 0.0
    %1438 = vmatprep.subr.mxu0 0.0
    %1439 = vmatpush1.msra.mxu0 0.0
    %1440 = vmatprep.subr.mxu0 0.0
    %1441 = vmatpush1.msra.mxu0 0.0
    %1442 = vmatprep.subr.mxu0 0.0
    %1443 = vmatpush1.msra.mxu0 0.0
    %1444 = vmatprep.subr.mxu0 0.0
    %1445 = vmatpush1.msra.mxu0 0.0
    %1446 = vmatprep.subr.mxu0 0.0
    %1447 = vmatpush1.msra.mxu0 0.0
    %1448 = vmatprep.subr.mxu0 0.0
    %1449 = vmatpush1.msra.mxu0 0.0
    %1450 = vmatprep.subr.mxu0 0.0
    %1451 = vmatpush1.msra.mxu0 0.0
    %1452 = vmatprep.subr.mxu0 0.0
    %1453 = vmatpush1.msra.mxu0 0.0
    %1454 = vmatprep.subr.mxu0 0.0
    %1455 = vmatpush1.msra.mxu0 0.0
    %1456 = vmatprep.subr.mxu0 0.0
    %1457 = vmatpush1.msra.mxu0 0.0
    %1458 = vmatprep.mubr.f32.mxu0 0.0
    %1459 = vmatmul.mubr.f32.gmra.mrb[0].mxu0 %v1309
    %v1460 = vpop.f32.mrb[0].mxu0
    %v1461 = vadd.f32 %v1392, %v1460
    %v1462 = vpop.f32.mrb[0].mxu0
    %1463 = vdwg.mxu0
    %s1464 = scalar_lea.vmem [#allocation5], 160
    %v1465 = vld [vmem:[%s1464] sm:$0xff]
    %v1466 = vld [vmem:[%s1464 + $0x8] sm:$0xff]
    %v1467 = vld [vmem:[%s1464 + $0x10] sm:$0xff]
    %v1468 = vld [vmem:[%s1464 + $0x18] sm:$0xff]
    %s1469 = scalar_lea.vmem %s7, 5
    %v1470 = vld [vmem:[%s1469] sm:$0x1]
    %v1472 = vlaneseq
    %v1473 = vshrl.u32 %v1472, 7
    %v1474 = vsub.s32 0, %v1473
    %v1475 = vrot.slane %v1470, %v1474
    %1477 = vmatprep.subr.mxu0 0.0
    %1478 = vmatpush1.msra.mxu0 %v1465
    %1479 = vmatprep.subr.mxu0 0.0
    %1480 = vmatpush1.msra.mxu0 %v1466
    %1481 = vmatprep.subr.mxu0 0.0
    %1482 = vmatpush1.msra.mxu0 %v1467
    %1483 = vmatprep.subr.mxu0 0.0
    %1484 = vmatpush1.msra.mxu0 %v1468
    %1485 = vmatprep.subr.mxu0 0.0
    %1486 = vmatpush1.msra.mxu0 0.0
    %1487 = vmatprep.subr.mxu0 0.0
    %1488 = vmatpush1.msra.mxu0 0.0
    %1489 = vmatprep.subr.mxu0 0.0
    %1490 = vmatpush1.msra.mxu0 0.0
    %1491 = vmatprep.subr.mxu0 0.0
    %1492 = vmatpush1.msra.mxu0 0.0
    %1493 = vmatprep.subr.mxu0 0.0
    %1494 = vmatpush1.msra.mxu0 0.0
    %1495 = vmatprep.subr.mxu0 0.0
    %1496 = vmatpush1.msra.mxu0 0.0
    %1497 = vmatprep.subr.mxu0 0.0
    %1498 = vmatpush1.msra.mxu0 0.0
    %1499 = vmatprep.subr.mxu0 0.0
    %1500 = vmatpush1.msra.mxu0 0.0
    %1501 = vmatprep.subr.mxu0 0.0
    %1502 = vmatpush1.msra.mxu0 0.0
    %1503 = vmatprep.subr.mxu0 0.0
    %1504 = vmatpush1.msra.mxu0 0.0
    %1505 = vmatprep.subr.mxu0 0.0
    %1506 = vmatpush1.msra.mxu0 0.0
    %1507 = vmatprep.subr.mxu0 0.0
    %1508 = vmatpush1.msra.mxu0 0.0
    %1509 = vmatprep.subr.mxu0 0.0
    %1510 = vmatpush1.msra.mxu0 0.0
    %1511 = vmatprep.subr.mxu0 0.0
    %1512 = vmatpush1.msra.mxu0 0.0
    %1513 = vmatprep.subr.mxu0 0.0
    %1514 = vmatpush1.msra.mxu0 0.0
    %1515 = vmatprep.subr.mxu0 0.0
    %1516 = vmatpush1.msra.mxu0 0.0
    %1517 = vmatprep.subr.mxu0 0.0
    %1518 = vmatpush1.msra.mxu0 0.0
    %1519 = vmatprep.subr.mxu0 0.0
    %1520 = vmatpush1.msra.mxu0 0.0
    %1521 = vmatprep.subr.mxu0 0.0
    %1522 = vmatpush1.msra.mxu0 0.0
    %1523 = vmatprep.subr.mxu0 0.0
    %1524 = vmatpush1.msra.mxu0 0.0
    %1525 = vmatprep.subr.mxu0 0.0
    %1526 = vmatpush1.msra.mxu0 0.0
    %1527 = vmatprep.subr.mxu0 0.0
    %1528 = vmatpush1.msra.mxu0 0.0
    %1529 = vmatprep.subr.mxu0 0.0
    %1530 = vmatpush1.msra.mxu0 0.0
    %1531 = vmatprep.subr.mxu0 0.0
    %1532 = vmatpush1.msra.mxu0 0.0
    %1533 = vmatprep.subr.mxu0 0.0
    %1534 = vmatpush1.msra.mxu0 0.0
    %1535 = vmatprep.subr.mxu0 0.0
    %1536 = vmatpush1.msra.mxu0 0.0
    %1537 = vmatprep.subr.mxu0 0.0
    %1538 = vmatpush1.msra.mxu0 0.0
    %1539 = vmatprep.subr.mxu0 0.0
    %1540 = vmatpush1.msra.mxu0 0.0
    %1541 = vmatprep.mubr.f32.mxu0 0.0
    %1542 = vmatmul.mubr.f32.gmra.mrb[0].mxu0 %v1309
    %v1543 = vpop.f32.mrb[0].mxu0
    %v1544 = vadd.f32 %v1475, %v1543
    %v1545 = vpop.f32.mrb[0].mxu0
    %1546 = vdwg.mxu0
    %v1547 = vadd.f32 %v1378, %v601
    %v1548 = vxor.u32 %v1547, 2147483648
    %v1549 = vmul.f32 %v1548, 1.442695
    %v1550 = vpow.pop %v1549
    %v1551 = vadd.f32 %v1550, 1.0
    %v1552 = vrcp.pop %v1551
    %v1553 = vmul.f32 1.0, %v1552
    %v1554 = vadd.f32 %v1461, %v684
    %v1555 = vxor.u32 %v1554, 2147483648
    %v1556 = vmul.f32 %v1555, 1.442695
    %v1557 = vpow.pop %v1556
    %v1558 = vadd.f32 %v1557, 1.0
    %v1559 = vrcp.pop %v1558
    %v1560 = vmul.f32 1.0, %v1559
    %v1561 = vmul.f32 %v1553, %v767
    %v1562 = vadd.f32 %v1544, %v1561
    %v1563 = vtanh.pop %v1562
    %v1564 = vsub.f32 1.0, %v1560
    %v1565 = vmul.f32 %v1564, %v1563
    %v1566 = vmul.f32 %v1560, %v264
    %v1567 = vadd.f32 %v1565, %v1566
    %1568 = vst.msk [vmem:[%s263] sm:$0x3] %vm1293, %v1567
    %s1569 = scalar_lea.vmem [#allocation5], 192
    %v1570 = vld [vmem:[%s1569] sm:$0xff]
    %v1571 = vld [vmem:[%s1569 + $0x8] sm:$0xff]
    %v1572 = vld [vmem:[%s1569 + $0x10] sm:$0xff]
    %v1573 = vld [vmem:[%s1569 + $0x18] sm:$0xff]
    %s1574 = scalar_lea.vmem %s7, 6
    %v1575 = vld [vmem:[%s1574] sm:$0x1]
    %v1577 = vlaneseq
    %v1578 = vshrl.u32 %v1577, 7
    %v1579 = vsub.s32 0, %v1578
    %v1580 = vrot.slane %v1575, %v1579
    %v1583 = vsel %vm278, %v1567, 0
    %1585 = vmatprep.subr.mxu0 0.0
    %1586 = vmatpush1.msra.mxu0 %v1570
    %1587 = vmatprep.subr.mxu0 0.0
    %1588 = vmatpush1.msra.mxu0 %v1571
    %1589 = vmatprep.subr.mxu0 0.0
    %1590 = vmatpush1.msra.mxu0 %v1572
    %1591 = vmatprep.subr.mxu0 0.0
    %1592 = vmatpush1.msra.mxu0 %v1573
    %1593 = vmatprep.subr.mxu0 0.0
    %1594 = vmatpush1.msra.mxu0 0.0
    %1595 = vmatprep.subr.mxu0 0.0
    %1596 = vmatpush1.msra.mxu0 0.0
    %1597 = vmatprep.subr.mxu0 0.0
    %1598 = vmatpush1.msra.mxu0 0.0
    %1599 = vmatprep.subr.mxu0 0.0
    %1600 = vmatpush1.msra.mxu0 0.0
    %1601 = vmatprep.subr.mxu0 0.0
    %1602 = vmatpush1.msra.mxu0 0.0
    %1603 = vmatprep.subr.mxu0 0.0
    %1604 = vmatpush1.msra.mxu0 0.0
    %1605 = vmatprep.subr.mxu0 0.0
    %1606 = vmatpush1.msra.mxu0 0.0
    %1607 = vmatprep.subr.mxu0 0.0
    %1608 = vmatpush1.msra.mxu0 0.0
    %1609 = vmatprep.subr.mxu0 0.0
    %1610 = vmatpush1.msra.mxu0 0.0
    %1611 = vmatprep.subr.mxu0 0.0
    %1612 = vmatpush1.msra.mxu0 0.0
    %1613 = vmatprep.subr.mxu0 0.0
    %1614 = vmatpush1.msra.mxu0 0.0
    %1615 = vmatprep.subr.mxu0 0.0
    %1616 = vmatpush1.msra.mxu0 0.0
    %1617 = vmatprep.subr.mxu0 0.0
    %1618 = vmatpush1.msra.mxu0 0.0
    %1619 = vmatprep.subr.mxu0 0.0
    %1620 = vmatpush1.msra.mxu0 0.0
    %1621 = vmatprep.subr.mxu0 0.0
    %1622 = vmatpush1.msra.mxu0 0.0
    %1623 = vmatprep.subr.mxu0 0.0
    %1624 = vmatpush1.msra.mxu0 0.0
    %1625 = vmatprep.subr.mxu0 0.0
    %1626 = vmatpush1.msra.mxu0 0.0
    %1627 = vmatprep.subr.mxu0 0.0
    %1628 = vmatpush1.msra.mxu0 0.0
    %1629 = vmatprep.subr.mxu0 0.0
    %1630 = vmatpush1.msra.mxu0 0.0
    %1631 = vmatprep.subr.mxu0 0.0
    %1632 = vmatpush1.msra.mxu0 0.0
    %1633 = vmatprep.subr.mxu0 0.0
    %1634 = vmatpush1.msra.mxu0 0.0
    %1635 = vmatprep.subr.mxu0 0.0
    %1636 = vmatpush1.msra.mxu0 0.0
    %1637 = vmatprep.subr.mxu0 0.0
    %1638 = vmatpush1.msra.mxu0 0.0
    %1639 = vmatprep.subr.mxu0 0.0
    %1640 = vmatpush1.msra.mxu0 0.0
    %1641 = vmatprep.subr.mxu0 0.0
    %1642 = vmatpush1.msra.mxu0 0.0
    %1643 = vmatprep.subr.mxu0 0.0
    %1644 = vmatpush1.msra.mxu0 0.0
    %1645 = vmatprep.subr.mxu0 0.0
    %1646 = vmatpush1.msra.mxu0 0.0
    %1647 = vmatprep.subr.mxu0 0.0
    %1648 = vmatpush1.msra.mxu0 0.0
    %1649 = vmatprep.mubr.f32.mxu0 0.0
    %1650 = vmatmul.mubr.f32.gmra.mrb[0].mxu0 %v1583
    %v1651 = vpop.f32.mrb[0].mxu0
    %v1652 = vadd.f32 %v1580, %v1651
    %v1653 = vpop.f32.mrb[0].mxu0
    %1654 = vdwg.mxu0
    %s1655 = scalar_lea.vmem [#allocation5], 224
    %v1656 = vld [vmem:[%s1655] sm:$0xff]
    %v1657 = vld [vmem:[%s1655 + $0x8] sm:$0xff]
    %v1658 = vld [vmem:[%s1655 + $0x10] sm:$0xff]
    %v1659 = vld [vmem:[%s1655 + $0x18] sm:$0xff]
    %s1660 = scalar_lea.vmem %s7, 7
    %v1661 = vld [vmem:[%s1660] sm:$0x1]
    %v1663 = vlaneseq
    %v1664 = vshrl.u32 %v1663, 7
    %v1665 = vsub.s32 0, %v1664
    %v1666 = vrot.slane %v1661, %v1665
    %1668 = vmatprep.subr.mxu0 0.0
    %1669 = vmatpush1.msra.mxu0 %v1656
    %1670 = vmatprep.subr.mxu0 0.0
    %1671 = vmatpush1.msra.mxu0 %v1657
    %1672 = vmatprep.subr.mxu0 0.0
    %1673 = vmatpush1.msra.mxu0 %v1658
    %1674 = vmatprep.subr.mxu0 0.0
    %1675 = vmatpush1.msra.mxu0 %v1659
    %1676 = vmatprep.subr.mxu0 0.0
    %1677 = vmatpush1.msra.mxu0 0.0
    %1678 = vmatprep.subr.mxu0 0.0
    %1679 = vmatpush1.msra.mxu0 0.0
    %1680 = vmatprep.subr.mxu0 0.0
    %1681 = vmatpush1.msra.mxu0 0.0
    %1682 = vmatprep.subr.mxu0 0.0
    %1683 = vmatpush1.msra.mxu0 0.0
    %1684 = vmatprep.subr.mxu0 0.0
    %1685 = vmatpush1.msra.mxu0 0.0
    %1686 = vmatprep.subr.mxu0 0.0
    %1687 = vmatpush1.msra.mxu0 0.0
    %1688 = vmatprep.subr.mxu0 0.0
    %1689 = vmatpush1.msra.mxu0 0.0
    %1690 = vmatprep.subr.mxu0 0.0
    %1691 = vmatpush1.msra.mxu0 0.0
    %1692 = vmatprep.subr.mxu0 0.0
    %1693 = vmatpush1.msra.mxu0 0.0
    %1694 = vmatprep.subr.mxu0 0.0
    %1695 = vmatpush1.msra.mxu0 0.0
    %1696 = vmatprep.subr.mxu0 0.0
    %1697 = vmatpush1.msra.mxu0 0.0
    %1698 = vmatprep.subr.mxu0 0.0
    %1699 = vmatpush1.msra.mxu0 0.0
    %1700 = vmatprep.subr.mxu0 0.0
    %1701 = vmatpush1.msra.mxu0 0.0
    %1702 = vmatprep.subr.mxu0 0.0
    %1703 = vmatpush1.msra.mxu0 0.0
    %1704 = vmatprep.subr.mxu0 0.0
    %1705 = vmatpush1.msra.mxu0 0.0
    %1706 = vmatprep.subr.mxu0 0.0
    %1707 = vmatpush1.msra.mxu0 0.0
    %1708 = vmatprep.subr.mxu0 0.0
    %1709 = vmatpush1.msra.mxu0 0.0
    %1710 = vmatprep.subr.mxu0 0.0
    %1711 = vmatpush1.msra.mxu0 0.0
    %1712 = vmatprep.subr.mxu0 0.0
    %1713 = vmatpush1.msra.mxu0 0.0
    %1714 = vmatprep.subr.mxu0 0.0
    %1715 = vmatpush1.msra.mxu0 0.0
    %1716 = vmatprep.subr.mxu0 0.0
    %1717 = vmatpush1.msra.mxu0 0.0
    %1718 = vmatprep.subr.mxu0 0.0
    %1719 = vmatpush1.msra.mxu0 0.0
    %1720 = vmatprep.subr.mxu0 0.0
    %1721 = vmatpush1.msra.mxu0 0.0
    %1722 = vmatprep.subr.mxu0 0.0
    %1723 = vmatpush1.msra.mxu0 0.0
    %1724 = vmatprep.subr.mxu0 0.0
    %1725 = vmatpush1.msra.mxu0 0.0
    %1726 = vmatprep.subr.mxu0 0.0
    %1727 = vmatpush1.msra.mxu0 0.0
    %1728 = vmatprep.subr.mxu0 0.0
    %1729 = vmatpush1.msra.mxu0 0.0
    %1730 = vmatprep.subr.mxu0 0.0
    %1731 = vmatpush1.msra.mxu0 0.0
    %1732 = vmatprep.mubr.f32.mxu0 0.0
    %1733 = vmatmul.mubr.f32.gmra.mrb[0].mxu0 %v1583
    %v1734 = vpop.f32.mrb[0].mxu0
    %v1735 = vadd.f32 %v1666, %v1734
    %v1736 = vpop.f32.mrb[0].mxu0
    %1737 = vdwg.mxu0
    %s1738 = scalar_lea.vmem [#allocation5], 256
    %v1739 = vld [vmem:[%s1738] sm:$0xff]
    %v1740 = vld [vmem:[%s1738 + $0x8] sm:$0xff]
    %v1741 = vld [vmem:[%s1738 + $0x10] sm:$0xff]
    %v1742 = vld [vmem:[%s1738 + $0x18] sm:$0xff]
    %s1743 = scalar_lea.vmem %s7, 8
    %v1744 = vld [vmem:[%s1743] sm:$0x1]
    %v1746 = vlaneseq
    %v1747 = vshrl.u32 %v1746, 7
    %v1748 = vsub.s32 0, %v1747
    %v1749 = vrot.slane %v1744, %v1748
    %1751 = vmatprep.subr.mxu0 0.0
    %1752 = vmatpush1.msra.mxu0 %v1739
    %1753 = vmatprep.subr.mxu0 0.0
    %1754 = vmatpush1.msra.mxu0 %v1740
    %1755 = vmatprep.subr.mxu0 0.0
    %1756 = vmatpush1.msra.mxu0 %v1741
    %1757 = vmatprep.subr.mxu0 0.0
    %1758 = vmatpush1.msra.mxu0 %v1742
    %1759 = vmatprep.subr.mxu0 0.0
    %1760 = vmatpush1.msra.mxu0 0.0
    %1761 = vmatprep.subr.mxu0 0.0
    %1762 = vmatpush1.msra.mxu0 0.0
    %1763 = vmatprep.subr.mxu0 0.0
    %1764 = vmatpush1.msra.mxu0 0.0
    %1765 = vmatprep.subr.mxu0 0.0
    %1766 = vmatpush1.msra.mxu0 0.0
    %1767 = vmatprep.subr.mxu0 0.0
    %1768 = vmatpush1.msra.mxu0 0.0
    %1769 = vmatprep.subr.mxu0 0.0
    %1770 = vmatpush1.msra.mxu0 0.0
    %1771 = vmatprep.subr.mxu0 0.0
    %1772 = vmatpush1.msra.mxu0 0.0
    %1773 = vmatprep.subr.mxu0 0.0
    %1774 = vmatpush1.msra.mxu0 0.0
    %1775 = vmatprep.subr.mxu0 0.0
    %1776 = vmatpush1.msra.mxu0 0.0
    %1777 = vmatprep.subr.mxu0 0.0
    %1778 = vmatpush1.msra.mxu0 0.0
    %1779 = vmatprep.subr.mxu0 0.0
    %1780 = vmatpush1.msra.mxu0 0.0
    %1781 = vmatprep.subr.mxu0 0.0
    %1782 = vmatpush1.msra.mxu0 0.0
    %1783 = vmatprep.subr.mxu0 0.0
    %1784 = vmatpush1.msra.mxu0 0.0
    %1785 = vmatprep.subr.mxu0 0.0
    %1786 = vmatpush1.msra.mxu0 0.0
    %1787 = vmatprep.subr.mxu0 0.0
    %1788 = vmatpush1.msra.mxu0 0.0
    %1789 = vmatprep.subr.mxu0 0.0
    %1790 = vmatpush1.msra.mxu0 0.0
    %1791 = vmatprep.subr.mxu0 0.0
    %1792 = vmatpush1.msra.mxu0 0.0
    %1793 = vmatprep.subr.mxu0 0.0
    %1794 = vmatpush1.msra.mxu0 0.0
    %1795 = vmatprep.subr.mxu0 0.0
    %1796 = vmatpush1.msra.mxu0 0.0
    %1797 = vmatprep.subr.mxu0 0.0
    %1798 = vmatpush1.msra.mxu0 0.0
    %1799 = vmatprep.subr.mxu0 0.0
    %1800 = vmatpush1.msra.mxu0 0.0
    %1801 = vmatprep.subr.mxu0 0.0
    %1802 = vmatpush1.msra.mxu0 0.0
    %1803 = vmatprep.subr.mxu0 0.0
    %1804 = vmatpush1.msra.mxu0 0.0
    %1805 = vmatprep.subr.mxu0 0.0
    %1806 = vmatpush1.msra.mxu0 0.0
    %1807 = vmatprep.subr.mxu0 0.0
    %1808 = vmatpush1.msra.mxu0 0.0
    %1809 = vmatprep.subr.mxu0 0.0
    %1810 = vmatpush1.msra.mxu0 0.0
    %1811 = vmatprep.subr.mxu0 0.0
    %1812 = vmatpush1.msra.mxu0 0.0
    %1813 = vmatprep.subr.mxu0 0.0
    %1814 = vmatpush1.msra.mxu0 0.0
    %1815 = vmatprep.mubr.f32.mxu0 0.0
    %1816 = vmatmul.mubr.f32.gmra.mrb[0].mxu0 %v1583
    %v1817 = vpop.f32.mrb[0].mxu0
    %v1818 = vadd.f32 %v1749, %v1817
    %v1819 = vpop.f32.mrb[0].mxu0
    %1820 = vdwg.mxu0
    %v1821 = vadd.f32 %v1652, %v853
    %v1822 = vxor.u32 %v1821, 2147483648
    %v1823 = vmul.f32 %v1822, 1.442695
    %v1824 = vpow.pop %v1823
    %v1825 = vadd.f32 %v1824, 1.0
    %v1826 = vrcp.pop %v1825
    %v1827 = vmul.f32 1.0, %v1826
    %v1828 = vadd.f32 %v1735, %v936
    %v1829 = vxor.u32 %v1828, 2147483648
    %v1830 = vmul.f32 %v1829, 1.442695
    %v1831 = vpow.pop %v1830
    %v1832 = vadd.f32 %v1831, 1.0
    %v1833 = vrcp.pop %v1832
    %v1834 = vmul.f32 1.0, %v1833
    %v1835 = vmul.f32 %v1827, %v1019
    %v1836 = vadd.f32 %v1818, %v1835
    %v1837 = vtanh.pop %v1836
    %v1838 = vsub.f32 1.0, %v1834
    %v1839 = vmul.f32 %v1838, %v1837
    %v1840 = vmul.f32 %v1834, %v266
    %v1841 = vadd.f32 %v1839, %v1840
    %1842 = vst.msk [vmem:[%s265] sm:$0x3] %vm1293, %v1841
    %v1843 = vld [vmem:[%s9] sm:$0xff]
    %v1844 = vld [vmem:[%s9 + $0x8] sm:$0xff]
    %v1845 = vld [vmem:[%s9 + $0x10] sm:$0xff]
    %v1846 = vld [vmem:[%s9 + $0x18] sm:$0xff]
    %s1847 = scalar_lea.vmem %s9, 32
    %v1848 = vld [vmem:[%s1847] sm:$0xff]
    %v1849 = vld [vmem:[%s1847 + $0x8] sm:$0xff]
    %v1850 = vld [vmem:[%s1847 + $0x10] sm:$0xff]
    %v1851 = vld [vmem:[%s1847 + $0x18] sm:$0xff]
    %1852 = vmatprep.subr.mxu0 0.0
    %1853 = vmatpush1.msra.mxu0 %v1848
    %1854 = vmatprep.subr.mxu0 0.0
    %1855 = vmatpush1.msra.mxu0 %v1849
    %1856 = vmatprep.subr.mxu0 0.0
    %1857 = vmatpush1.msra.mxu0 %v1850
    %1858 = vmatprep.subr.mxu0 0.0
    %1859 = vmatpush1.msra.mxu0 %v1851
    %1860 = vmatprep.subr.mxu0 0.0
    %1861 = vmatpush1.msra.mxu0 0.0
    %1862 = vmatprep.subr.mxu0 0.0
    %1863 = vmatpush1.msra.mxu0 0.0
    %1864 = vmatprep.subr.mxu0 0.0
    %1865 = vmatpush1.msra.mxu0 0.0
    %1866 = vmatprep.subr.mxu0 0.0
    %1867 = vmatpush1.msra.mxu0 0.0
    %1868 = vmatprep.subr.mxu0 0.0
    %1869 = vmatpush1.msra.mxu0 0.0
    %1870 = vmatprep.subr.mxu0 0.0
    %1871 = vmatpush1.msra.mxu0 0.0
    %1872 = vmatprep.subr.mxu0 0.0
    %1873 = vmatpush1.msra.mxu0 0.0
    %1874 = vmatprep.subr.mxu0 0.0
    %1875 = vmatpush1.msra.mxu0 0.0
    %1876 = vmatprep.subr.mxu0 0.0
    %1877 = vmatpush1.msra.mxu0 0.0
    %1878 = vmatprep.subr.mxu0 0.0
    %1879 = vmatpush1.msra.mxu0 0.0
    %1880 = vmatprep.subr.mxu0 0.0
    %1881 = vmatpush1.msra.mxu0 0.0
    %1882 = vmatprep.subr.mxu0 0.0
    %1883 = vmatpush1.msra.mxu0 0.0
    %1884 = vmatprep.subr.mxu0 0.0
    %1885 = vmatpush1.msra.mxu0 0.0
    %1886 = vmatprep.subr.mxu0 0.0
    %1887 = vmatpush1.msra.mxu0 0.0
    %1888 = vmatprep.subr.mxu0 0.0
    %1889 = vmatpush1.msra.mxu0 0.0
    %1890 = vmatprep.subr.mxu0 0.0
    %1891 = vmatpush1.msra.mxu0 0.0
    %1892 = vmatprep.subr.mxu0 0.0
    %1893 = vmatpush1.msra.mxu0 0.0
    %1894 = vmatprep.subr.mxu0 0.0
    %1895 = vmatpush1.msra.mxu0 0.0
    %1896 = vmatprep.subr.mxu0 0.0
    %1897 = vmatpush1.msra.mxu0 0.0
    %1898 = vmatprep.subr.mxu0 0.0
    %1899 = vmatpush1.msra.mxu0 0.0
    %1900 = vmatprep.subr.mxu0 0.0
    %1901 = vmatpush1.msra.mxu0 0.0
    %1902 = vmatprep.subr.mxu0 0.0
    %1903 = vmatpush1.msra.mxu0 0.0
    %1904 = vmatprep.subr.mxu0 0.0
    %1905 = vmatpush1.msra.mxu0 0.0
    %1906 = vmatprep.subr.mxu0 0.0
    %1907 = vmatpush1.msra.mxu0 0.0
    %1908 = vmatprep.subr.mxu0 0.0
    %1909 = vmatpush1.msra.mxu0 0.0
    %1910 = vmatprep.subr.mxu0 0.0
    %1911 = vmatpush1.msra.mxu0 0.0
    %1912 = vmatprep.subr.mxu0 0.0
    %1913 = vmatpush1.msra.mxu0 0.0
    %1914 = vmatprep.subr.mxu0 0.0
    %1915 = vmatpush1.msra.mxu0 0.0
    %1916 = vmatprep.mubr.f32.mxu0 0.0
    %1917 = vmatmul.mubr.f32.gmra.mrb[0].mxu0 %v1583
    %v1918 = vpop.f32.mrb[0].mxu0
    %v1919 = vadd.f32 0.0, %v1918
    %v1920 = vpop.f32.mrb[0].mxu0
    %1921 = vdwg.mxu0
    %1922 = vmatprep.subr.mxu0 0.0
    %1923 = vmatpush1.msra.mxu0 %v1843
    %1924 = vmatprep.subr.mxu0 0.0
    %1925 = vmatpush1.msra.mxu0 %v1844
    %1926 = vmatprep.subr.mxu0 0.0
    %1927 = vmatpush1.msra.mxu0 %v1845
    %1928 = vmatprep.subr.mxu0 0.0
    %1929 = vmatpush1.msra.mxu0 %v1846
    %1930 = vmatprep.subr.mxu0 0.0
    %1931 = vmatpush1.msra.mxu0 0.0
    %1932 = vmatprep.subr.mxu0 0.0
    %1933 = vmatpush1.msra.mxu0 0.0
    %1934 = vmatprep.subr.mxu0 0.0
    %1935 = vmatpush1.msra.mxu0 0.0
    %1936 = vmatprep.subr.mxu0 0.0
    %1937 = vmatpush1.msra.mxu0 0.0
    %1938 = vmatprep.subr.mxu0 0.0
    %1939 = vmatpush1.msra.mxu0 0.0
    %1940 = vmatprep.subr.mxu0 0.0
    %1941 = vmatpush1.msra.mxu0 0.0
    %1942 = vmatprep.subr.mxu0 0.0
    %1943 = vmatpush1.msra.mxu0 0.0
    %1944 = vmatprep.subr.mxu0 0.0
    %1945 = vmatpush1.msra.mxu0 0.0
    %1946 = vmatprep.subr.mxu0 0.0
    %1947 = vmatpush1.msra.mxu0 0.0
    %1948 = vmatprep.subr.mxu0 0.0
    %1949 = vmatpush1.msra.mxu0 0.0
    %1950 = vmatprep.subr.mxu0 0.0
    %1951 = vmatpush1.msra.mxu0 0.0
    %1952 = vmatprep.subr.mxu0 0.0
    %1953 = vmatpush1.msra.mxu0 0.0
    %1954 = vmatprep.subr.mxu0 0.0
    %1955 = vmatpush1.msra.mxu0 0.0
    %1956 = vmatprep.subr.mxu0 0.0
    %1957 = vmatpush1.msra.mxu0 0.0
    %1958 = vmatprep.subr.mxu0 0.0
    %1959 = vmatpush1.msra.mxu0 0.0
    %1960 = vmatprep.subr.mxu0 0.0
    %1961 = vmatpush1.msra.mxu0 0.0
    %1962 = vmatprep.subr.mxu0 0.0
    %1963 = vmatpush1.msra.mxu0 0.0
    %1964 = vmatprep.subr.mxu0 0.0
    %1965 = vmatpush1.msra.mxu0 0.0
    %1966 = vmatprep.subr.mxu0 0.0
    %1967 = vmatpush1.msra.mxu0 0.0
    %1968 = vmatprep.subr.mxu0 0.0
    %1969 = vmatpush1.msra.mxu0 0.0
    %1970 = vmatprep.subr.mxu0 0.0
    %1971 = vmatpush1.msra.mxu0 0.0
    %1972 = vmatprep.subr.mxu0 0.0
    %1973 = vmatpush1.msra.mxu0 0.0
    %1974 = vmatprep.subr.mxu0 0.0
    %1975 = vmatpush1.msra.mxu0 0.0
    %1976 = vmatprep.subr.mxu0 0.0
    %1977 = vmatpush1.msra.mxu0 0.0
    %1978 = vmatprep.subr.mxu0 0.0
    %1979 = vmatpush1.msra.mxu0 0.0
    %1980 = vmatprep.subr.mxu0 0.0
    %1981 = vmatpush1.msra.mxu0 0.0
    %1982 = vmatprep.subr.mxu0 0.0
    %1983 = vmatpush1.msra.mxu0 0.0
    %1984 = vmatprep.subr.mxu0 0.0
    %1985 = vmatpush1.msra.mxu0 0.0
    %1986 = vmatprep.mubr.f32.mxu0 0.0
    %1987 = vmatmul.mubr.f32.gmra.mrb[0].mxu0 %v1309
    %v1988 = vpop.f32.mrb[0].mxu0
    %v1989 = vadd.f32 %v1919, %v1988
    %v1990 = vpop.f32.mrb[0].mxu0
    %1991 = vdwg.mxu0
    %s1992 = scalar_lea.vmem %s9, 64
    %v1993 = vld [vmem:[%s1992] sm:$0xff]
    %v1994 = vld [vmem:[%s1992 + $0x8] sm:$0xff]
    %v1995 = vld [vmem:[%s1992 + $0x10] sm:$0xff]
    %v1996 = vld [vmem:[%s1992 + $0x18] sm:$0xff]
    %v1998 = vsel %vm278, %v1841, 0
    %2000 = vmatprep.subr.mxu0 0.0
    %2001 = vmatpush1.msra.mxu0 %v1993
    %2002 = vmatprep.subr.mxu0 0.0
    %2003 = vmatpush1.msra.mxu0 %v1994
    %2004 = vmatprep.subr.mxu0 0.0
    %2005 = vmatpush1.msra.mxu0 %v1995
    %2006 = vmatprep.subr.mxu0 0.0
    %2007 = vmatpush1.msra.mxu0 %v1996
    %2008 = vmatprep.subr.mxu0 0.0
    %2009 = vmatpush1.msra.mxu0 0.0
    %2010 = vmatprep.subr.mxu0 0.0
    %2011 = vmatpush1.msra.mxu0 0.0
    %2012 = vmatprep.subr.mxu0 0.0
    %2013 = vmatpush1.msra.mxu0 0.0
    %2014 = vmatprep.subr.mxu0 0.0
    %2015 = vmatpush1.msra.mxu0 0.0
    %2016 = vmatprep.subr.mxu0 0.0
    %2017 = vmatpush1.msra.mxu0 0.0
    %2018 = vmatprep.subr.mxu0 0.0
    %2019 = vmatpush1.msra.mxu0 0.0
    %2020 = vmatprep.subr.mxu0 0.0
    %2021 = vmatpush1.msra.mxu0 0.0
    %2022 = vmatprep.subr.mxu0 0.0
    %2023 = vmatpush1.msra.mxu0 0.0
    %2024 = vmatprep.subr.mxu0 0.0
    %2025 = vmatpush1.msra.mxu0 0.0
    %2026 = vmatprep.subr.mxu0 0.0
    %2027 = vmatpush1.msra.mxu0 0.0
    %2028 = vmatprep.subr.mxu0 0.0
    %2029 = vmatpush1.msra.mxu0 0.0
    %2030 = vmatprep.subr.mxu0 0.0
    %2031 = vmatpush1.msra.mxu0 0.0
    %2032 = vmatprep.subr.mxu0 0.0
    %2033 = vmatpush1.msra.mxu0 0.0
    %2034 = vmatprep.subr.mxu0 0.0
    %2035 = vmatpush1.msra.mxu0 0.0
    %2036 = vmatprep.subr.mxu0 0.0
    %2037 = vmatpush1.msra.mxu0 0.0
    %2038 = vmatprep.subr.mxu0 0.0
    %2039 = vmatpush1.msra.mxu0 0.0
    %2040 = vmatprep.subr.mxu0 0.0
    %2041 = vmatpush1.msra.mxu0 0.0
    %2042 = vmatprep.subr.mxu0 0.0
    %2043 = vmatpush1.msra.mxu0 0.0
    %2044 = vmatprep.subr.mxu0 0.0
    %2045 = vmatpush1.msra.mxu0 0.0
    %2046 = vmatprep.subr.mxu0 0.0
    %2047 = vmatpush1.msra.mxu0 0.0
    %2048 = vmatprep.subr.mxu0 0.0
    %2049 = vmatpush1.msra.mxu0 0.0
    %2050 = vmatprep.subr.mxu0 0.0
    %2051 = vmatpush1.msra.mxu0 0.0
    %2052 = vmatprep.subr.mxu0 0.0
    %2053 = vmatpush1.msra.mxu0 0.0
    %2054 = vmatprep.subr.mxu0 0.0
    %2055 = vmatpush1.msra.mxu0 0.0
    %2056 = vmatprep.subr.mxu0 0.0
    %2057 = vmatpush1.msra.mxu0 0.0
    %2058 = vmatprep.subr.mxu0 0.0
    %2059 = vmatpush1.msra.mxu0 0.0
    %2060 = vmatprep.subr.mxu0 0.0
    %2061 = vmatpush1.msra.mxu0 0.0
    %2062 = vmatprep.subr.mxu0 0.0
    %2063 = vmatpush1.msra.mxu0 0.0
    %2064 = vmatprep.mubr.f32.mxu0 0.0
    %2065 = vmatmul.mubr.f32.gmra.mrb[0].mxu0 %v1998
    %v2066 = vpop.f32.mrb[0].mxu0
    %v2067 = vadd.f32 0.0, %v2066
    %v2068 = vpop.f32.mrb[0].mxu0
    %2069 = vdwg.mxu0
    %v2070 = vadd.f32 %v1989, %v2067
    %v2071 = vld [vmem:[%s10] sm:$0x1]
    %v2073 = vlaneseq
    %v2074 = vshrl.u32 %v2073, 7
    %v2075 = vsub.s32 0, %v2074
    %v2076 = vrot.slane %v2071, %v2075
    %v2078 = vadd.f32 %v2070, %v2076
    %vm2079 = vcmask 123904
    %2080 = vst.msk [vmem:[#allocation8] sm:$0x3] %vm2079, %v2078
    // Predicated region
    $region62: #{_forward_seq_impl.1} parent=1 // pred_check
      _
    $region63: #{_forward_seq_impl.1} parent=1 // pred_check_branch
      %2082 = sbr.rel (0) target = $region65
    $region64: #{_forward_seq_impl.1} parent=1 // pred_region
      %s2084 = ssub.s32 32, 32
      %2085 = vsyncadd [#allocation4], %s2084
      %s2087 = sshll.u32 [#allocation8], 4
      %s2088 = int_to_ptr.vmem [resolvable:$true] %s2087
      %2090 = dma.vmem_to_hbm [thread:$0]  %s2088, 32, %s11, [#allocation4]
    $region65: #{_forward_seq_impl.1} parent=1 // pred_fallthru
      _
    // Predicated region
    $region66: #{_forward_seq_impl.1} parent=1 // pred_check
      _
    $region67: #{_forward_seq_impl.1} parent=1 // pred_check_branch
      %2092 = sbr.rel (0) target = $region69
    $region68: #{_forward_seq_impl.1} parent=1 // pred_region
      %s2094 = ssub.s32 96, 96
      %2095 = vsyncadd [#allocation10], %s2094
      %s2096 = sshll.u32 [#allocation9], 4
      %s2097 = int_to_ptr.vmem [resolvable:$true] %s2096
      %2102 = dma.vmem_to_hbm [thread:$0]  %s2097, 96, %s12, [#allocation10], 32, 32, 2
    $region69: #{_forward_seq_impl.1} parent=1 // pred_fallthru
      _
    // Predicated region
    $region70: #{_forward_seq_impl.1} parent=1 // pred_check
      _
    $region71: #{_forward_seq_impl.1} parent=1 // pred_check_branch
      %2104 = sbr.rel (0) target = $region73
    $region72: #{_forward_seq_impl.1} parent=1 // pred_region
      %2105 = dma.done [#allocation4], 32
    $region73: #{_forward_seq_impl.1} parent=1 // pred_fallthru
      _
    // Predicated region
    $region74: #{_forward_seq_impl.1} parent=1 // pred_check
      _
    $region75: #{_forward_seq_impl.1} parent=1 // pred_check_branch
      %2107 = sbr.rel (0) target = $region77
    $region76: #{_forward_seq_impl.1} parent=1 // pred_region
      %2108 = dma.done [#allocation10], 96
    $region77: #{_forward_seq_impl.1} parent=1 // pred_fallthru
      _
    %2109 = vsyncpa [#allocation3], 1
    %2110 = vsyncpa [#allocation6], 1
    %2111 = vsyncpa [#allocation4], 1
    %2112 = vsyncpa [#allocation10], 1

</llo_original>
